<compile_context>
chip_gen: v7x
topology: tpu7x:2x2x1
jax: 0.10.0
libtpu: 0.0.40
codegen_flags: <defaults>
</compile_context>

<pallas_src>
import jax
import jax.numpy as jnp
from jax.experimental import pallas as pl
from jax.experimental.pallas import tpu as pltpu


def _round_up(n, m):
    return ((n + m - 1) // m) * m


def _pad2(a, rows, cols):
    return jnp.pad(a, ((0, rows - a.shape[0]), (0, cols - a.shape[1])))


# --------------------------------------------------------------------------
# Fused kernel: stacked RNN layers + LayerNorm(last step) + Linear head.
# --------------------------------------------------------------------------
def _make_fused_kernel(S, Bp, H, Hp, num_layers, eps=1e-5):
    inv_h = 1.0 / float(H)  # LayerNorm statistics use the *real* hidden size

    def kernel(*refs):
        # refs: x, [w_ih, w_hh, b] * L, gamma, beta, w_out, b_out, out, act_scratch
        x_ref = refs[0]
        pos = 1
        layer_refs = []
        for _ in range(num_layers):
            layer_refs.append(refs[pos:pos + 3])
            pos += 3
        gamma_ref, beta_ref, wout_ref, bout_ref = refs[pos:pos + 4]
        pos += 4
        o_ref = refs[pos]
        act_ref = refs[pos + 1]  # VMEM scratch (S*Bp, Hp)

        cur = x_ref[...]  # (S*Bp, Dp) flattened time-major input for layer 0
        h_last = jnp.zeros((Bp, Hp), jnp.float32)

        for li, (wih_ref, whh_ref, b_ref) in enumerate(layer_refs):
            is_last = li == num_layers - 1
            whh = whh_ref[...]  # hoisted: read once per layer, not per step

            # Hoisted time-parallel input projection: one big MXU matmul + bias, all steps.
            act_ref[...] = (
                jnp.dot(cur, wih_ref[...], preferred_element_type=jnp.float32)
                + b_ref[...]
            )

            def step(t, h):
                row = pl.ds(pl.multiple_of(t * Bp, Bp), Bp)
                p_t = act_ref[row, :]
                h_new = jnp.tanh(
                    p_t + jnp.dot(h, whh, preferred_element_type=jnp.float32)
                )
                if not is_last:
                    # Overwrite P[t] with h_t: scratch becomes next layer's input sequence.
                    act_ref[row, :] = h_new
                return h_new

            h_last = jax.lax.fori_loop(
                0, S, step, jnp.zeros((Bp, Hp), jnp.float32), unroll=True
            )
            if not is_last:
                cur = act_ref[...]  # (S*Bp, Hp) hidden sequence -> next layer

        # ------- LayerNorm on the last hidden state (padded H lanes are exactly 0) -------
        h = h_last
        mean = jnp.sum(h, axis=-1, keepdims=True) * inv_h
        ex2 = jnp.sum(h * h, axis=-1, keepdims=True) * inv_h
        var = ex2 - mean * mean  # biased variance, like nn.LayerNorm
        xn = (h - mean) * jax.lax.rsqrt(var + eps)
        y = xn * gamma_ref[...] + beta_ref[...]  # padded gamma/beta = 0 -> padded lanes 0

        # ------- Linear head, lane-dense (Bp, Op) output -------
        o_ref[...] = (
            jnp.dot(y, wout_ref[...], preferred_element_type=jnp.float32)
            + bout_ref[...]
        ).astype(o_ref.dtype)

    return kernel


# --------------------------------------------------------------------------
# Parameters (stored pre-transposed as [in, out], biases pre-summed).
# --------------------------------------------------------------------------
def init_params(key, input_size, hidden_size, num_layers, output_size):
    params = {"layers": []}
    k = 1.0 / jnp.sqrt(hidden_size)
    for layer in range(num_layers):
        d_in = input_size if layer == 0 else hidden_size
        key, k1, k2, k3, k4 = jax.random.split(key, 5)
        w_ih = jax.random.uniform(k1, (d_in, hidden_size), jnp.float32, -k, k)
        w_hh = jax.random.uniform(k2, (hidden_size, hidden_size), jnp.float32, -k, k)
        b_ih = jax.random.uniform(k3, (1, hidden_size), jnp.float32, -k, k)
        b_hh = jax.random.uniform(k4, (1, hidden_size), jnp.float32, -k, k)
        params["layers"].append((w_ih, w_hh, b_ih + b_hh))  # biases always summed
    params["gamma"] = jnp.ones((1, hidden_size), jnp.float32)
    params["beta"] = jnp.zeros((1, hidden_size), jnp.float32)
    key, k5, k6 = jax.random.split(key, 3)
    kl = 1.0 / jnp.sqrt(hidden_size)
    params["w_out"] = jax.random.uniform(
        k5, (hidden_size, output_size), jnp.float32, -kl, kl
    )
    params["b_out"] = jax.random.uniform(k6, (1, output_size), jnp.float32, -kl, kl)
    return params


# --------------------------------------------------------------------------
# Full forward: pad/transpose in the wrapper, one fused pallas_call, slice out.
# --------------------------------------------------------------------------
@jax.jit
def rnn_forward(x_bsd, params):
    """x_bsd: [batch, seq, input_size] -> [batch, output_size] (inference)."""
    # TODO(synk): inter-layer dropout (training-mode only in PyTorch) is not applied.
    B, S, D = x_bsd.shape
    layers = params["layers"]
    L = len(layers)
    H = layers[0][1].shape[0]
    O = params["w_out"].shape[1]

    Bp = _round_up(max(B, 8), 8)        # sublane grain
    Dp = _round_up(max(D, 128), 128)    # lane grain
    Hp = _round_up(max(H, 128), 128)
    Op = _round_up(max(O, 128), 128)

    # Time-major, zero-padded, flattened to (S*Bp, Dp) for the hoisted input projection.
    x = jnp.transpose(x_bsd.astype(jnp.float32), (1, 0, 2))  # (S, B, D)
    x = jnp.pad(x, ((0, 0), (0, Bp - B), (0, Dp - D))).reshape(S * Bp, Dp)

    inputs = [x]
    in_specs = [pl.BlockSpec((S * Bp, Dp), lambda i: (0, 0))]
    for li, (w_ih, w_hh, b) in enumerate(layers):
        din_p = Dp if li == 0 else Hp
        inputs += [_pad2(w_ih, din_p, Hp), _pad2(w_hh, Hp, Hp), _pad2(b, 1, Hp)]
        in_specs += [
            pl.BlockSpec((din_p, Hp), lambda i: (0, 0)),
            pl.BlockSpec((Hp, Hp), lambda i: (0, 0)),
            pl.BlockSpec((1, Hp), lambda i: (0, 0)),
        ]
    inputs += [
        _pad2(params["gamma"], 1, Hp),
        _pad2(params["beta"], 1, Hp),
        _pad2(params["w_out"], Hp, Op),
        _pad2(params["b_out"], 1, Op),
    ]
    in_specs += [
        pl.BlockSpec((1, Hp), lambda i: (0, 0)),
        pl.BlockSpec((1, Hp), lambda i: (0, 0)),
        pl.BlockSpec((Hp, Op), lambda i: (0, 0)),
        pl.BlockSpec((1, Op), lambda i: (0, 0)),
    ]

    kernel = _make_fused_kernel(S=S, Bp=Bp, H=H, Hp=Hp, num_layers=L)

    out_padded = pl.pallas_call(
        kernel,
        out_shape=jax.ShapeDtypeStruct((Bp, Op), jnp.float32),
        grid_spec=pltpu.PrefetchScalarGridSpec(
            num_scalar_prefetch=0,
            grid=(1,),
            in_specs=in_specs,
            out_specs=pl.BlockSpec((Bp, Op), lambda i: (0, 0)),
            scratch_shapes=[pltpu.VMEM((S * Bp, Hp), jnp.float32)],
        ),
        compiler_params=pltpu.CompilerParams(
            dimension_semantics=("arbitrary",),  # recurrence is inherently sequential
        ),
    )(*inputs)
    return out_padded[:B, :O]


if __name__ == "__main__":
    # Small config consistent with the module's forward: x is [batch, seq, input_size].
    batch, seq_len = 2, 8
    input_size, hidden_size, num_layers, output_size = 16, 32, 2, 10

    key = jax.random.PRNGKey(0)
    key, kx, kp = jax.random.split(key, 3)
    x = jax.random.normal(kx, (batch, seq_len, input_size), jnp.float32)
    params = init_params(kp, input_size, hidden_size, num_layers, output_size)

    out = rnn_forward(x, params)
    jax.block_until_ready(out)
    assert out.shape == (batch, output_size), out.shape

    # Cross-check against a pure-JAX reference of the same math.
    def ref_forward(x, params):
        h = jnp.transpose(x, (1, 0, 2))
        for (w_ih, w_hh, b) in params["layers"]:
            def step(hprev, xt):
                hn = jnp.tanh(xt @ w_ih + hprev @ w_hh + b[0])
                return hn, hn
            h0 = jnp.zeros((h.shape[1], w_hh.shape[0]), jnp.float32)
            _, h = jax.lax.scan(step, h0, h)
        last = h[-1]
        mean = last.mean(-1, keepdims=True)
        var = ((last - mean) ** 2).mean(-1, keepdims=True)
        y = (last - mean) * jax.lax.rsqrt(var + 1e-5) * params["gamma"] + params["beta"]
        return y @ params["w_out"] + params["b_out"]

    ref = ref_forward(x, params)
    assert jnp.allclose(out, ref, atol=1e-4, rtol=1e-4), (out, ref)

    print("KERNEL_OK")
</pallas_src>

<mosaic_0001>
module attributes {stable_mosaic.version = 11 : i64} {
  func.func @kernel(%arg0: i32, %arg1: memref<64x128xf32, #tpu.memory_space<vmem>>, %arg2: memref<128x128xf32, #tpu.memory_space<vmem>>, %arg3: memref<128x128xf32, #tpu.memory_space<vmem>>, %arg4: memref<1x128xf32, #tpu.memory_space<vmem>>, %arg5: memref<128x128xf32, #tpu.memory_space<vmem>>, %arg6: memref<128x128xf32, #tpu.memory_space<vmem>>, %arg7: memref<1x128xf32, #tpu.memory_space<vmem>>, %arg8: memref<1x128xf32, #tpu.memory_space<vmem>>, %arg9: memref<1x128xf32, #tpu.memory_space<vmem>>, %arg10: memref<128x128xf32, #tpu.memory_space<vmem>>, %arg11: memref<1x128xf32, #tpu.memory_space<vmem>>, %arg12: memref<8x128xf32, #tpu.memory_space<vmem>>, %arg13: memref<64x128xf32, #tpu.memory_space<vmem>>) attributes {dimension_semantics = [#tpu.dimension_semantics<arbitrary>], iteration_bounds = array<i64: 1>, scalar_prefetch = 0 : i64, scratch_operands = 1 : i64, tpu.core_type = #tpu.core_type<tc>, window_params = [{pipeline_mode = #tpu.pipeline_mode<synchronous>, transform_indices = @transform_0, window_bounds = array<i64: 64, 128>}, {pipeline_mode = #tpu.pipeline_mode<synchronous>, transform_indices = @transform_1, window_bounds = array<i64: 128, 128>}, {pipeline_mode = #tpu.pipeline_mode<synchronous>, transform_indices = @transform_2, window_bounds = array<i64: 128, 128>}, {pipeline_mode = #tpu.pipeline_mode<synchronous>, transform_indices = @transform_3, window_bounds = array<i64: 1, 128>}, {pipeline_mode = #tpu.pipeline_mode<synchronous>, transform_indices = @transform_4, window_bounds = array<i64: 128, 128>}, {pipeline_mode = #tpu.pipeline_mode<synchronous>, transform_indices = @transform_5, window_bounds = array<i64: 128, 128>}, {pipeline_mode = #tpu.pipeline_mode<synchronous>, transform_indices = @transform_6, window_bounds = array<i64: 1, 128>}, {pipeline_mode = #tpu.pipeline_mode<synchronous>, transform_indices = @transform_7, window_bounds = array<i64: 1, 128>}, {pipeline_mode = #tpu.pipeline_mode<synchronous>, transform_indices = @transform_8, window_bounds = array<i64: 1, 128>}, {pipeline_mode = #tpu.pipeline_mode<synchronous>, transform_indices = @transform_9, window_bounds = array<i64: 128, 128>}, {pipeline_mode = #tpu.pipeline_mode<synchronous>, transform_indices = @transform_10, window_bounds = array<i64: 1, 128>}, {pipeline_mode = #tpu.pipeline_mode<synchronous>, transform_indices = @transform_11, window_bounds = array<i64: 8, 128>}]} {
    %c0 = arith.constant 0 : index
    %c0_0 = arith.constant 0 : index
    %0 = vector.load %arg1[%c0, %c0_0] : memref<64x128xf32, #tpu.memory_space<vmem>>, vector<64x128xf32>
    %c0_1 = arith.constant 0 : index
    %c0_2 = arith.constant 0 : index
    %1 = vector.load %arg3[%c0_1, %c0_2] : memref<128x128xf32, #tpu.memory_space<vmem>>, vector<128x128xf32>
    %c0_3 = arith.constant 0 : index
    %c0_4 = arith.constant 0 : index
    %2 = vector.load %arg2[%c0_3, %c0_4] : memref<128x128xf32, #tpu.memory_space<vmem>>, vector<128x128xf32>
    %cst = arith.constant dense<0.000000e+00> : vector<64x128xf32>
    %3 = tpu.matmul %0, %2, %cst {dimension_numbers = #tpu.dot_dimension_numbers<[1], [0], [0], [1], [0, 0, 1, 1], [], []>} : vector<64x128xf32>, vector<128x128xf32>, vector<64x128xf32> -> vector<64x128xf32>
    %c0_5 = arith.constant 0 : index
    %c0_6 = arith.constant 0 : index
    %4 = vector.load %arg4[%c0_5, %c0_6] : memref<1x128xf32, #tpu.memory_space<vmem>>, vector<1x128xf32>
    %5 = vector.broadcast %4 : vector<1x128xf32> to vector<64x128xf32>
    %6 = arith.addf %3, %5 : vector<64x128xf32>
    %c0_7 = arith.constant 0 : index
    %c0_8 = arith.constant 0 : index
    %7 = vector.load %arg13[%c0_7, %c0_8] : memref<64x128xf32, #tpu.memory_space<vmem>>, vector<64x128xf32>
    tpu.vector_store %arg13[%c0_7, %c0_8], %6 {strides = array<i32>} : memref<64x128xf32, #tpu.memory_space<vmem>>, vector<64x128xf32>,
    %cst_9 = arith.constant 0.000000e+00 : f32
    %8 = vector.broadcast %cst_9 : f32 to vector<8x128xf32>
    %c0_i32 = arith.constant 0 : i32
    %c8_i32 = arith.constant 8 : i32
    %9 = arith.muli %c0_i32, %c8_i32 : i32
    %10 = tpu.assume_multiple %9, 8 : i32
    %11 = arith.index_cast %10 : i32 to index
    %c0_10 = arith.constant 0 : index
    %12 = vector.load %arg13[%11, %c0_10] : memref<64x128xf32, #tpu.memory_space<vmem>>, vector<8x128xf32>
    %cst_11 = arith.constant dense<0.000000e+00> : vector<8x128xf32>
    %13 = tpu.matmul %8, %1, %cst_11 {dimension_numbers = #tpu.dot_dimension_numbers<[1], [0], [0], [1], [0, 0, 1, 1], [], []>} : vector<8x128xf32>, vector<128x128xf32>, vector<8x128xf32> -> vector<8x128xf32>
    %14 = arith.addf %12, %13 : vector<8x128xf32>
    %15 = math.tanh %14 : vector<8x128xf32>
    %16 = arith.index_cast %10 : i32 to index
    %c0_12 = arith.constant 0 : index
    %17 = vector.load %arg13[%16, %c0_12] : memref<64x128xf32, #tpu.memory_space<vmem>>, vector<8x128xf32>
    tpu.vector_store %arg13[%16, %c0_12], %15 {strides = array<i32>} : memref<64x128xf32, #tpu.memory_space<vmem>>, vector<8x128xf32>,
    %c1_i32 = arith.constant 1 : i32
    %c8_i32_13 = arith.constant 8 : i32
    %18 = arith.muli %c1_i32, %c8_i32_13 : i32
    %19 = tpu.assume_multiple %18, 8 : i32
    %20 = arith.index_cast %19 : i32 to index
    %c0_14 = arith.constant 0 : index
    %21 = vector.load %arg13[%20, %c0_14] : memref<64x128xf32, #tpu.memory_space<vmem>>, vector<8x128xf32>
    %cst_15 = arith.constant dense<0.000000e+00> : vector<8x128xf32>
    %22 = tpu.matmul %15, %1, %cst_15 {dimension_numbers = #tpu.dot_dimension_numbers<[1], [0], [0], [1], [0, 0, 1, 1], [], []>} : vector<8x128xf32>, vector<128x128xf32>, vector<8x128xf32> -> vector<8x128xf32>
    %23 = arith.addf %21, %22 : vector<8x128xf32>
    %24 = math.tanh %23 : vector<8x128xf32>
    %25 = arith.index_cast %19 : i32 to index
    %c0_16 = arith.constant 0 : index
    %26 = vector.load %arg13[%25, %c0_16] : memref<64x128xf32, #tpu.memory_space<vmem>>, vector<8x128xf32>
    tpu.vector_store %arg13[%25, %c0_16], %24 {strides = array<i32>} : memref<64x128xf32, #tpu.memory_space<vmem>>, vector<8x128xf32>,
    %c2_i32 = arith.constant 2 : i32
    %c8_i32_17 = arith.constant 8 : i32
    %27 = arith.muli %c2_i32, %c8_i32_17 : i32
    %28 = tpu.assume_multiple %27, 8 : i32
    %29 = arith.index_cast %28 : i32 to index
    %c0_18 = arith.constant 0 : index
    %30 = vector.load %arg13[%29, %c0_18] : memref<64x128xf32, #tpu.memory_space<vmem>>, vector<8x128xf32>
    %cst_19 = arith.constant dense<0.000000e+00> : vector<8x128xf32>
    %31 = tpu.matmul %24, %1, %cst_19 {dimension_numbers = #tpu.dot_dimension_numbers<[1], [0], [0], [1], [0, 0, 1, 1], [], []>} : vector<8x128xf32>, vector<128x128xf32>, vector<8x128xf32> -> vector<8x128xf32>
    %32 = arith.addf %30, %31 : vector<8x128xf32>
    %33 = math.tanh %32 : vector<8x128xf32>
    %34 = arith.index_cast %28 : i32 to index
    %c0_20 = arith.constant 0 : index
    %35 = vector.load %arg13[%34, %c0_20] : memref<64x128xf32, #tpu.memory_space<vmem>>, vector<8x128xf32>
    tpu.vector_store %arg13[%34, %c0_20], %33 {strides = array<i32>} : memref<64x128xf32, #tpu.memory_space<vmem>>, vector<8x128xf32>,
    %c3_i32 = arith.constant 3 : i32
    %c8_i32_21 = arith.constant 8 : i32
    %36 = arith.muli %c3_i32, %c8_i32_21 : i32
    %37 = tpu.assume_multiple %36, 8 : i32
    %38 = arith.index_cast %37 : i32 to index
    %c0_22 = arith.constant 0 : index
    %39 = vector.load %arg13[%38, %c0_22] : memref<64x128xf32, #tpu.memory_space<vmem>>, vector<8x128xf32>
    %cst_23 = arith.constant dense<0.000000e+00> : vector<8x128xf32>
    %40 = tpu.matmul %33, %1, %cst_23 {dimension_numbers = #tpu.dot_dimension_numbers<[1], [0], [0], [1], [0, 0, 1, 1], [], []>} : vector<8x128xf32>, vector<128x128xf32>, vector<8x128xf32> -> vector<8x128xf32>
    %41 = arith.addf %39, %40 : vector<8x128xf32>
    %42 = math.tanh %41 : vector<8x128xf32>
    %43 = arith.index_cast %37 : i32 to index
    %c0_24 = arith.constant 0 : index
    %44 = vector.load %arg13[%43, %c0_24] : memref<64x128xf32, #tpu.memory_space<vmem>>, vector<8x128xf32>
    tpu.vector_store %arg13[%43, %c0_24], %42 {strides = array<i32>} : memref<64x128xf32, #tpu.memory_space<vmem>>, vector<8x128xf32>,
    %c4_i32 = arith.constant 4 : i32
    %c8_i32_25 = arith.constant 8 : i32
    %45 = arith.muli %c4_i32, %c8_i32_25 : i32
    %46 = tpu.assume_multiple %45, 8 : i32
    %47 = arith.index_cast %46 : i32 to index
    %c0_26 = arith.constant 0 : index
    %48 = vector.load %arg13[%47, %c0_26] : memref<64x128xf32, #tpu.memory_space<vmem>>, vector<8x128xf32>
    %cst_27 = arith.constant dense<0.000000e+00> : vector<8x128xf32>
    %49 = tpu.matmul %42, %1, %cst_27 {dimension_numbers = #tpu.dot_dimension_numbers<[1], [0], [0], [1], [0, 0, 1, 1], [], []>} : vector<8x128xf32>, vector<128x128xf32>, vector<8x128xf32> -> vector<8x128xf32>
    %50 = arith.addf %48, %49 : vector<8x128xf32>
    %51 = math.tanh %50 : vector<8x128xf32>
    %52 = arith.index_cast %46 : i32 to index
    %c0_28 = arith.constant 0 : index
    %53 = vector.load %arg13[%52, %c0_28] : memref<64x128xf32, #tpu.memory_space<vmem>>, vector<8x128xf32>
    tpu.vector_store %arg13[%52, %c0_28], %51 {strides = array<i32>} : memref<64x128xf32, #tpu.memory_space<vmem>>, vector<8x128xf32>,
    %c5_i32 = arith.constant 5 : i32
    %c8_i32_29 = arith.constant 8 : i32
    %54 = arith.muli %c5_i32, %c8_i32_29 : i32
    %55 = tpu.assume_multiple %54, 8 : i32
    %56 = arith.index_cast %55 : i32 to index
    %c0_30 = arith.constant 0 : index
    %57 = vector.load %arg13[%56, %c0_30] : memref<64x128xf32, #tpu.memory_space<vmem>>, vector<8x128xf32>
    %cst_31 = arith.constant dense<0.000000e+00> : vector<8x128xf32>
    %58 = tpu.matmul %51, %1, %cst_31 {dimension_numbers = #tpu.dot_dimension_numbers<[1], [0], [0], [1], [0, 0, 1, 1], [], []>} : vector<8x128xf32>, vector<128x128xf32>, vector<8x128xf32> -> vector<8x128xf32>
    %59 = arith.addf %57, %58 : vector<8x128xf32>
    %60 = math.tanh %59 : vector<8x128xf32>
    %61 = arith.index_cast %55 : i32 to index
    %c0_32 = arith.constant 0 : index
    %62 = vector.load %arg13[%61, %c0_32] : memref<64x128xf32, #tpu.memory_space<vmem>>, vector<8x128xf32>
    tpu.vector_store %arg13[%61, %c0_32], %60 {strides = array<i32>} : memref<64x128xf32, #tpu.memory_space<vmem>>, vector<8x128xf32>,
    %c6_i32 = arith.constant 6 : i32
    %c8_i32_33 = arith.constant 8 : i32
    %63 = arith.muli %c6_i32, %c8_i32_33 : i32
    %64 = tpu.assume_multiple %63, 8 : i32
    %65 = arith.index_cast %64 : i32 to index
    %c0_34 = arith.constant 0 : index
    %66 = vector.load %arg13[%65, %c0_34] : memref<64x128xf32, #tpu.memory_space<vmem>>, vector<8x128xf32>
    %cst_35 = arith.constant dense<0.000000e+00> : vector<8x128xf32>
    %67 = tpu.matmul %60, %1, %cst_35 {dimension_numbers = #tpu.dot_dimension_numbers<[1], [0], [0], [1], [0, 0, 1, 1], [], []>} : vector<8x128xf32>, vector<128x128xf32>, vector<8x128xf32> -> vector<8x128xf32>
    %68 = arith.addf %66, %67 : vector<8x128xf32>
    %69 = math.tanh %68 : vector<8x128xf32>
    %70 = arith.index_cast %64 : i32 to index
    %c0_36 = arith.constant 0 : index
    %71 = vector.load %arg13[%70, %c0_36] : memref<64x128xf32, #tpu.memory_space<vmem>>, vector<8x128xf32>
    tpu.vector_store %arg13[%70, %c0_36], %69 {strides = array<i32>} : memref<64x128xf32, #tpu.memory_space<vmem>>, vector<8x128xf32>,
    %c7_i32 = arith.constant 7 : i32
    %c8_i32_37 = arith.constant 8 : i32
    %72 = arith.muli %c7_i32, %c8_i32_37 : i32
    %73 = tpu.assume_multiple %72, 8 : i32
    %74 = arith.index_cast %73 : i32 to index
    %c0_38 = arith.constant 0 : index
    %75 = vector.load %arg13[%74, %c0_38] : memref<64x128xf32, #tpu.memory_space<vmem>>, vector<8x128xf32>
    %cst_39 = arith.constant dense<0.000000e+00> : vector<8x128xf32>
    %76 = tpu.matmul %69, %1, %cst_39 {dimension_numbers = #tpu.dot_dimension_numbers<[1], [0], [0], [1], [0, 0, 1, 1], [], []>} : vector<8x128xf32>, vector<128x128xf32>, vector<8x128xf32> -> vector<8x128xf32>
    %77 = arith.addf %75, %76 : vector<8x128xf32>
    %78 = math.tanh %77 : vector<8x128xf32>
    %79 = arith.index_cast %73 : i32 to index
    %c0_40 = arith.constant 0 : index
    %80 = vector.load %arg13[%79, %c0_40] : memref<64x128xf32, #tpu.memory_space<vmem>>, vector<8x128xf32>
    tpu.vector_store %arg13[%79, %c0_40], %78 {strides = array<i32>} : memref<64x128xf32, #tpu.memory_space<vmem>>, vector<8x128xf32>,
    %c8_i32_41 = arith.constant 8 : i32
    %c0_42 = arith.constant 0 : index
    %c0_43 = arith.constant 0 : index
    %81 = vector.load %arg13[%c0_42, %c0_43] : memref<64x128xf32, #tpu.memory_space<vmem>>, vector<64x128xf32>
    %c0_44 = arith.constant 0 : index
    %c0_45 = arith.constant 0 : index
    %82 = vector.load %arg6[%c0_44, %c0_45] : memref<128x128xf32, #tpu.memory_space<vmem>>, vector<128x128xf32>
    %c0_46 = arith.constant 0 : index
    %c0_47 = arith.constant 0 : index
    %83 = vector.load %arg5[%c0_46, %c0_47] : memref<128x128xf32, #tpu.memory_space<vmem>>, vector<128x128xf32>
    %cst_48 = arith.constant dense<0.000000e+00> : vector<64x128xf32>
    %84 = tpu.matmul %81, %83, %cst_48 {dimension_numbers = #tpu.dot_dimension_numbers<[1], [0], [0], [1], [0, 0, 1, 1], [], []>} : vector<64x128xf32>, vector<128x128xf32>, vector<64x128xf32> -> vector<64x128xf32>
    %c0_49 = arith.constant 0 : index
    %c0_50 = arith.constant 0 : index
    %85 = vector.load %arg7[%c0_49, %c0_50] : memref<1x128xf32, #tpu.memory_space<vmem>>, vector<1x128xf32>
    %86 = vector.broadcast %85 : vector<1x128xf32> to vector<64x128xf32>
    %87 = arith.addf %84, %86 : vector<64x128xf32>
    %c0_51 = arith.constant 0 : index
    %c0_52 = arith.constant 0 : index
    %88 = vector.load %arg13[%c0_51, %c0_52] : memref<64x128xf32, #tpu.memory_space<vmem>>, vector<64x128xf32>
    tpu.vector_store %arg13[%c0_51, %c0_52], %87 {strides = array<i32>} : memref<64x128xf32, #tpu.memory_space<vmem>>, vector<64x128xf32>,
    %cst_53 = arith.constant 0.000000e+00 : f32
    %89 = vector.broadcast %cst_53 : f32 to vector<8x128xf32>
    %c0_i32_54 = arith.constant 0 : i32
    %c8_i32_55 = arith.constant 8 : i32
    %90 = arith.muli %c0_i32_54, %c8_i32_55 : i32
    %91 = tpu.assume_multiple %90, 8 : i32
    %92 = arith.index_cast %91 : i32 to index
    %c0_56 = arith.constant 0 : index
    %93 = vector.load %arg13[%92, %c0_56] : memref<64x128xf32, #tpu.memory_space<vmem>>, vector<8x128xf32>
    %cst_57 = arith.constant dense<0.000000e+00> : vector<8x128xf32>
    %94 = tpu.matmul %89, %82, %cst_57 {dimension_numbers = #tpu.dot_dimension_numbers<[1], [0], [0], [1], [0, 0, 1, 1], [], []>} : vector<8x128xf32>, vector<128x128xf32>, vector<8x128xf32> -> vector<8x128xf32>
    %95 = arith.addf %93, %94 : vector<8x128xf32>
    %96 = math.tanh %95 : vector<8x128xf32>
    %c1_i32_58 = arith.constant 1 : i32
    %c8_i32_59 = arith.constant 8 : i32
    %97 = arith.muli %c1_i32_58, %c8_i32_59 : i32
    %98 = tpu.assume_multiple %97, 8 : i32
    %99 = arith.index_cast %98 : i32 to index
    %c0_60 = arith.constant 0 : index
    %100 = vector.load %arg13[%99, %c0_60] : memref<64x128xf32, #tpu.memory_space<vmem>>, vector<8x128xf32>
    %cst_61 = arith.constant dense<0.000000e+00> : vector<8x128xf32>
    %101 = tpu.matmul %96, %82, %cst_61 {dimension_numbers = #tpu.dot_dimension_numbers<[1], [0], [0], [1], [0, 0, 1, 1], [], []>} : vector<8x128xf32>, vector<128x128xf32>, vector<8x128xf32> -> vector<8x128xf32>
    %102 = arith.addf %100, %101 : vector<8x128xf32>
    %103 = math.tanh %102 : vector<8x128xf32>
    %c2_i32_62 = arith.constant 2 : i32
    %c8_i32_63 = arith.constant 8 : i32
    %104 = arith.muli %c2_i32_62, %c8_i32_63 : i32
    %105 = tpu.assume_multiple %104, 8 : i32
    %106 = arith.index_cast %105 : i32 to index
    %c0_64 = arith.constant 0 : index
    %107 = vector.load %arg13[%106, %c0_64] : memref<64x128xf32, #tpu.memory_space<vmem>>, vector<8x128xf32>
    %cst_65 = arith.constant dense<0.000000e+00> : vector<8x128xf32>
    %108 = tpu.matmul %103, %82, %cst_65 {dimension_numbers = #tpu.dot_dimension_numbers<[1], [0], [0], [1], [0, 0, 1, 1], [], []>} : vector<8x128xf32>, vector<128x128xf32>, vector<8x128xf32> -> vector<8x128xf32>
    %109 = arith.addf %107, %108 : vector<8x128xf32>
    %110 = math.tanh %109 : vector<8x128xf32>
    %c3_i32_66 = arith.constant 3 : i32
    %c8_i32_67 = arith.constant 8 : i32
    %111 = arith.muli %c3_i32_66, %c8_i32_67 : i32
    %112 = tpu.assume_multiple %111, 8 : i32
    %113 = arith.index_cast %112 : i32 to index
    %c0_68 = arith.constant 0 : index
    %114 = vector.load %arg13[%113, %c0_68] : memref<64x128xf32, #tpu.memory_space<vmem>>, vector<8x128xf32>
    %cst_69 = arith.constant dense<0.000000e+00> : vector<8x128xf32>
    %115 = tpu.matmul %110, %82, %cst_69 {dimension_numbers = #tpu.dot_dimension_numbers<[1], [0], [0], [1], [0, 0, 1, 1], [], []>} : vector<8x128xf32>, vector<128x128xf32>, vector<8x128xf32> -> vector<8x128xf32>
    %116 = arith.addf %114, %115 : vector<8x128xf32>
    %117 = math.tanh %116 : vector<8x128xf32>
    %c4_i32_70 = arith.constant 4 : i32
    %c8_i32_71 = arith.constant 8 : i32
    %118 = arith.muli %c4_i32_70, %c8_i32_71 : i32
    %119 = tpu.assume_multiple %118, 8 : i32
    %120 = arith.index_cast %119 : i32 to index
    %c0_72 = arith.constant 0 : index
    %121 = vector.load %arg13[%120, %c0_72] : memref<64x128xf32, #tpu.memory_space<vmem>>, vector<8x128xf32>
    %cst_73 = arith.constant dense<0.000000e+00> : vector<8x128xf32>
    %122 = tpu.matmul %117, %82, %cst_73 {dimension_numbers = #tpu.dot_dimension_numbers<[1], [0], [0], [1], [0, 0, 1, 1], [], []>} : vector<8x128xf32>, vector<128x128xf32>, vector<8x128xf32> -> vector<8x128xf32>
    %123 = arith.addf %121, %122 : vector<8x128xf32>
    %124 = math.tanh %123 : vector<8x128xf32>
    %c5_i32_74 = arith.constant 5 : i32
    %c8_i32_75 = arith.constant 8 : i32
    %125 = arith.muli %c5_i32_74, %c8_i32_75 : i32
    %126 = tpu.assume_multiple %125, 8 : i32
    %127 = arith.index_cast %126 : i32 to index
    %c0_76 = arith.constant 0 : index
    %128 = vector.load %arg13[%127, %c0_76] : memref<64x128xf32, #tpu.memory_space<vmem>>, vector<8x128xf32>
    %cst_77 = arith.constant dense<0.000000e+00> : vector<8x128xf32>
    %129 = tpu.matmul %124, %82, %cst_77 {dimension_numbers = #tpu.dot_dimension_numbers<[1], [0], [0], [1], [0, 0, 1, 1], [], []>} : vector<8x128xf32>, vector<128x128xf32>, vector<8x128xf32> -> vector<8x128xf32>
    %130 = arith.addf %128, %129 : vector<8x128xf32>
    %131 = math.tanh %130 : vector<8x128xf32>
    %c6_i32_78 = arith.constant 6 : i32
    %c8_i32_79 = arith.constant 8 : i32
    %132 = arith.muli %c6_i32_78, %c8_i32_79 : i32
    %133 = tpu.assume_multiple %132, 8 : i32
    %134 = arith.index_cast %133 : i32 to index
    %c0_80 = arith.constant 0 : index
    %135 = vector.load %arg13[%134, %c0_80] : memref<64x128xf32, #tpu.memory_space<vmem>>, vector<8x128xf32>
    %cst_81 = arith.constant dense<0.000000e+00> : vector<8x128xf32>
    %136 = tpu.matmul %131, %82, %cst_81 {dimension_numbers = #tpu.dot_dimension_numbers<[1], [0], [0], [1], [0, 0, 1, 1], [], []>} : vector<8x128xf32>, vector<128x128xf32>, vector<8x128xf32> -> vector<8x128xf32>
    %137 = arith.addf %135, %136 : vector<8x128xf32>
    %138 = math.tanh %137 : vector<8x128xf32>
    %c7_i32_82 = arith.constant 7 : i32
    %c8_i32_83 = arith.constant 8 : i32
    %139 = arith.muli %c7_i32_82, %c8_i32_83 : i32
    %140 = tpu.assume_multiple %139, 8 : i32
    %141 = arith.index_cast %140 : i32 to index
    %c0_84 = arith.constant 0 : index
    %142 = vector.load %arg13[%141, %c0_84] : memref<64x128xf32, #tpu.memory_space<vmem>>, vector<8x128xf32>
    %cst_85 = arith.constant dense<0.000000e+00> : vector<8x128xf32>
    %143 = tpu.matmul %138, %82, %cst_85 {dimension_numbers = #tpu.dot_dimension_numbers<[1], [0], [0], [1], [0, 0, 1, 1], [], []>} : vector<8x128xf32>, vector<128x128xf32>, vector<8x128xf32> -> vector<8x128xf32>
    %144 = arith.addf %142, %143 : vector<8x128xf32>
    %145 = math.tanh %144 : vector<8x128xf32>
    %c8_i32_86 = arith.constant 8 : i32
    %cst_87 = arith.constant dense<0.000000e+00> : vector<8xf32>
    %146 = vector.multi_reduction <add>, %145, %cst_87 [1] : vector<8x128xf32> to vector<8xf32>
    %147 = vector.shape_cast %146 : vector<8xf32> to vector<8x1xf32>
    %cst_88 = arith.constant 3.125000e-02 : f32
    %148 = vector.broadcast %cst_88 : f32 to vector<8x1xf32>
    %149 = arith.mulf %147, %148 : vector<8x1xf32>
    %150 = arith.mulf %145, %145 : vector<8x128xf32>
    %cst_89 = arith.constant dense<0.000000e+00> : vector<8xf32>
    %151 = vector.multi_reduction <add>, %150, %cst_89 [1] : vector<8x128xf32> to vector<8xf32>
    %152 = vector.shape_cast %151 : vector<8xf32> to vector<8x1xf32>
    %cst_90 = arith.constant 3.125000e-02 : f32
    %153 = vector.broadcast %cst_90 : f32 to vector<8x1xf32>
    %154 = arith.mulf %152, %153 : vector<8x1xf32>
    %155 = arith.mulf %149, %149 : vector<8x1xf32>
    %156 = arith.subf %154, %155 : vector<8x1xf32>
    %157 = vector.broadcast %149 : vector<8x1xf32> to vector<8x128xf32>
    %158 = arith.subf %145, %157 : vector<8x128xf32>
    %cst_91 = arith.constant 9.99999974E-6 : f32
    %159 = vector.broadcast %cst_91 : f32 to vector<8x1xf32>
    %160 = arith.addf %156, %159 : vector<8x1xf32>
    %161 = math.rsqrt %160 : vector<8x1xf32>
    %162 = vector.broadcast %161 : vector<8x1xf32> to vector<8x128xf32>
    %163 = arith.mulf %158, %162 : vector<8x128xf32>
    %c0_92 = arith.constant 0 : index
    %c0_93 = arith.constant 0 : index
    %164 = vector.load %arg8[%c0_92, %c0_93] : memref<1x128xf32, #tpu.memory_space<vmem>>, vector<1x128xf32>
    %165 = vector.broadcast %164 : vector<1x128xf32> to vector<8x128xf32>
    %166 = arith.mulf %163, %165 : vector<8x128xf32>
    %c0_94 = arith.constant 0 : index
    %c0_95 = arith.constant 0 : index
    %167 = vector.load %arg9[%c0_94, %c0_95] : memref<1x128xf32, #tpu.memory_space<vmem>>, vector<1x128xf32>
    %168 = vector.broadcast %167 : vector<1x128xf32> to vector<8x128xf32>
    %169 = arith.addf %166, %168 : vector<8x128xf32>
    %c0_96 = arith.constant 0 : index
    %c0_97 = arith.constant 0 : index
    %170 = vector.load %arg10[%c0_96, %c0_97] : memref<128x128xf32, #tpu.memory_space<vmem>>, vector<128x128xf32>
    %cst_98 = arith.constant dense<0.000000e+00> : vector<8x128xf32>
    %171 = tpu.matmul %169, %170, %cst_98 {dimension_numbers = #tpu.dot_dimension_numbers<[1], [0], [0], [1], [0, 0, 1, 1], [], []>} : vector<8x128xf32>, vector<128x128xf32>, vector<8x128xf32> -> vector<8x128xf32>
    %c0_99 = arith.constant 0 : index
    %c0_100 = arith.constant 0 : index
    %172 = vector.load %arg11[%c0_99, %c0_100] : memref<1x128xf32, #tpu.memory_space<vmem>>, vector<1x128xf32>
    %173 = vector.broadcast %172 : vector<1x128xf32> to vector<8x128xf32>
    %174 = arith.addf %171, %173 : vector<8x128xf32>
    %c0_101 = arith.constant 0 : index
    %c0_102 = arith.constant 0 : index
    %175 = vector.load %arg12[%c0_101, %c0_102] : memref<8x128xf32, #tpu.memory_space<vmem>>, vector<8x128xf32>
    tpu.vector_store %arg12[%c0_101, %c0_102], %174 {strides = array<i32>} : memref<8x128xf32, #tpu.memory_space<vmem>>, vector<8x128xf32>,
    return
  }
  func.func @transform_0(%arg0: i32) -> (i32, i32) {
    %c0_i32 = arith.constant 0 : i32
    %c0_i32_0 = arith.constant 0 : i32
    %c0_i32_1 = arith.constant 0 : i32
    return %c0_i32, %c0_i32_0 : i32, i32
  }
  func.func @transform_1(%arg0: i32) -> (i32, i32) {
    %c0_i32 = arith.constant 0 : i32
    %c0_i32_0 = arith.constant 0 : i32
    %c0_i32_1 = arith.constant 0 : i32
    return %c0_i32, %c0_i32_0 : i32, i32
  }
  func.func @transform_2(%arg0: i32) -> (i32, i32) {
    %c0_i32 = arith.constant 0 : i32
    %c0_i32_0 = arith.constant 0 : i32
    %c0_i32_1 = arith.constant 0 : i32
    return %c0_i32, %c0_i32_0 : i32, i32
  }
  func.func @transform_3(%arg0: i32) -> (i32, i32) {
    %c0_i32 = arith.constant 0 : i32
    %c0_i32_0 = arith.constant 0 : i32
    %c0_i32_1 = arith.constant 0 : i32
    return %c0_i32, %c0_i32_0 : i32, i32
  }
  func.func @transform_4(%arg0: i32) -> (i32, i32) {
    %c0_i32 = arith.constant 0 : i32
    %c0_i32_0 = arith.constant 0 : i32
    %c0_i32_1 = arith.constant 0 : i32
    return %c0_i32, %c0_i32_0 : i32, i32
  }
  func.func @transform_5(%arg0: i32) -> (i32, i32) {
    %c0_i32 = arith.constant 0 : i32
    %c0_i32_0 = arith.constant 0 : i32
    %c0_i32_1 = arith.constant 0 : i32
    return %c0_i32, %c0_i32_0 : i32, i32
  }
  func.func @transform_6(%arg0: i32) -> (i32, i32) {
    %c0_i32 = arith.constant 0 : i32
    %c0_i32_0 = arith.constant 0 : i32
    %c0_i32_1 = arith.constant 0 : i32
    return %c0_i32, %c0_i32_0 : i32, i32
  }
  func.func @transform_7(%arg0: i32) -> (i32, i32) {
    %c0_i32 = arith.constant 0 : i32
    %c0_i32_0 = arith.constant 0 : i32
    %c0_i32_1 = arith.constant 0 : i32
    return %c0_i32, %c0_i32_0 : i32, i32
  }
  func.func @transform_8(%arg0: i32) -> (i32, i32) {
    %c0_i32 = arith.constant 0 : i32
    %c0_i32_0 = arith.constant 0 : i32
    %c0_i32_1 = arith.constant 0 : i32
    return %c0_i32, %c0_i32_0 : i32, i32
  }
  func.func @transform_9(%arg0: i32) -> (i32, i32) {
    %c0_i32 = arith.constant 0 : i32
    %c0_i32_0 = arith.constant 0 : i32
    %c0_i32_1 = arith.constant 0 : i32
    return %c0_i32, %c0_i32_0 : i32, i32
  }
  func.func @transform_10(%arg0: i32) -> (i32, i32) {
    %c0_i32 = arith.constant 0 : i32
    %c0_i32_0 = arith.constant 0 : i32
    %c0_i32_1 = arith.constant 0 : i32
    return %c0_i32, %c0_i32_0 : i32, i32
  }
  func.func @transform_11(%arg0: i32) -> (i32, i32) {
    %c0_i32 = arith.constant 0 : i32
    %c0_i32_0 = arith.constant 0 : i32
    %c0_i32_1 = arith.constant 0 : i32
    return %c0_i32, %c0_i32_0 : i32, i32
  }
}

</mosaic_0001>

<llo_original>
// kernel: rnn_forward.1
$region0: #{rnn_forward.1}
  #allocation0 [shape = 'u32[]', space=smem, size = 0x4, offset = 0x4, fixed_abs, tag = 'smem constant byte address 0x4 - core index']
  #allocation1 [shape = 'u32[144,128]{1,0:T(1,128)}', space=vmem, size = 0x12000, scoped, tag = 'internal scratch']
  #allocation2 [shape = 'f32[64,128]{1,0:T(8,128)}', space=vmem, size = 0x8000, scoped, tag = 'scratch operand']
  %s0 = inlined_call_operand.vmem [shape: f32[64,128], index: 0, kind: input, shape index: {}]
  %s1 = inlined_call_operand.vmem [shape: f32[128,128], index: 1, kind: input, shape index: {}]
  %s2 = inlined_call_operand.vmem [shape: f32[128,128], index: 2, kind: input, shape index: {}]
  %s3 = inlined_call_operand.vmem [shape: f32[1,128], index: 3, kind: input, shape index: {}]
  %s4 = inlined_call_operand.vmem [shape: f32[128,128], index: 4, kind: input, shape index: {}]
  %s5 = inlined_call_operand.vmem [shape: f32[128,128], index: 5, kind: input, shape index: {}]
  %s6 = inlined_call_operand.vmem [shape: f32[1,128], index: 6, kind: input, shape index: {}]
  %s7 = inlined_call_operand.vmem [shape: f32[1,128], index: 7, kind: input, shape index: {}]
  %s8 = inlined_call_operand.vmem [shape: f32[1,128], index: 8, kind: input, shape index: {}]
  %s9 = inlined_call_operand.vmem [shape: f32[128,128], index: 9, kind: input, shape index: {}]
  %s10 = inlined_call_operand.vmem [shape: f32[1,128], index: 10, kind: input, shape index: {}]
  %s11 = inlined_call_operand.vmem [shape: f32[8,128], index: 11, kind: output, shape index: {}]
  %s12 = sld [smem:[#allocation0]]
  $region54: #{rnn_forward.1} parent=0
    _
  %s14 = ssub.s32 1, %s12
  %s15 = scalar_select 0, %s14, %s12
  // Predicated region
  $region2: #{rnn_forward.1} parent=0 // pred_check
    _
  $region3: #{rnn_forward.1} parent=0 // pred_check_branch
    %17 = sbr.rel (0) target = $region5
  $region4: #{rnn_forward.1} parent=0 // pred_region
    _
  $region5: #{rnn_forward.1} parent=0 // pred_fallthru
    _
  // Predicated region
  $region6: #{rnn_forward.1} parent=0 // pred_check
    _
  $region7: #{rnn_forward.1} parent=0 // pred_check_branch
    %19 = sbr.rel (0) target = $region9
  $region8: #{rnn_forward.1} parent=0 // pred_region
    _
  $region9: #{rnn_forward.1} parent=0 // pred_fallthru
    _
  // Predicated region
  $region10: #{rnn_forward.1} parent=0 // pred_check
    _
  $region11: #{rnn_forward.1} parent=0 // pred_check_branch
    %21 = sbr.rel (0) target = $region13
  $region12: #{rnn_forward.1} parent=0 // pred_region
    _
  $region13: #{rnn_forward.1} parent=0 // pred_fallthru
    _
  // Predicated region
  $region14: #{rnn_forward.1} parent=0 // pred_check
    _
  $region15: #{rnn_forward.1} parent=0 // pred_check_branch
    %23 = sbr.rel (0) target = $region17
  $region16: #{rnn_forward.1} parent=0 // pred_region
    _
  $region17: #{rnn_forward.1} parent=0 // pred_fallthru
    _
  // Predicated region
  $region18: #{rnn_forward.1} parent=0 // pred_check
    _
  $region19: #{rnn_forward.1} parent=0 // pred_check_branch
    %25 = sbr.rel (0) target = $region21
  $region20: #{rnn_forward.1} parent=0 // pred_region
    _
  $region21: #{rnn_forward.1} parent=0 // pred_fallthru
    _
  // Predicated region
  $region22: #{rnn_forward.1} parent=0 // pred_check
    _
  $region23: #{rnn_forward.1} parent=0 // pred_check_branch
    %27 = sbr.rel (0) target = $region25
  $region24: #{rnn_forward.1} parent=0 // pred_region
    _
  $region25: #{rnn_forward.1} parent=0 // pred_fallthru
    _
  // Predicated region
  $region26: #{rnn_forward.1} parent=0 // pred_check
    _
  $region27: #{rnn_forward.1} parent=0 // pred_check_branch
    %29 = sbr.rel (0) target = $region29
  $region28: #{rnn_forward.1} parent=0 // pred_region
    _
  $region29: #{rnn_forward.1} parent=0 // pred_fallthru
    _
  // Predicated region
  $region30: #{rnn_forward.1} parent=0 // pred_check
    _
  $region31: #{rnn_forward.1} parent=0 // pred_check_branch
    %31 = sbr.rel (0) target = $region33
  $region32: #{rnn_forward.1} parent=0 // pred_region
    _
  $region33: #{rnn_forward.1} parent=0 // pred_fallthru
    _
  // Predicated region
  $region34: #{rnn_forward.1} parent=0 // pred_check
    _
  $region35: #{rnn_forward.1} parent=0 // pred_check_branch
    %33 = sbr.rel (0) target = $region37
  $region36: #{rnn_forward.1} parent=0 // pred_region
    _
  $region37: #{rnn_forward.1} parent=0 // pred_fallthru
    _
  // Predicated region
  $region38: #{rnn_forward.1} parent=0 // pred_check
    _
  $region39: #{rnn_forward.1} parent=0 // pred_check_branch
    %35 = sbr.rel (0) target = $region41
  $region40: #{rnn_forward.1} parent=0 // pred_region
    _
  $region41: #{rnn_forward.1} parent=0 // pred_fallthru
    _
  // Predicated region
  $region42: #{rnn_forward.1} parent=0 // pred_check
    _
  $region43: #{rnn_forward.1} parent=0 // pred_check_branch
    %37 = sbr.rel (0) target = $region45
  $region44: #{rnn_forward.1} parent=0 // pred_region
    _
  $region45: #{rnn_forward.1} parent=0 // pred_fallthru
    _
  %v38 = vld [vmem:[%s0] sm:$0xff]
  %v39 = vld [vmem:[%s0 + $0x8] sm:$0xff]
  %v40 = vld [vmem:[%s0 + $0x10] sm:$0xff]
  %v41 = vld [vmem:[%s0 + $0x18] sm:$0xff]
  %v42 = vld [vmem:[%s0 + $0x20] sm:$0xff]
  %v43 = vld [vmem:[%s0 + $0x28] sm:$0xff]
  %v44 = vld [vmem:[%s0 + $0x30] sm:$0xff]
  %v45 = vld [vmem:[%s0 + $0x38] sm:$0xff]
  %v46 = vld [vmem:[%s2] sm:$0xff]
  %v47 = vld [vmem:[%s2 + $0x8] sm:$0xff]
  %v48 = vld [vmem:[%s2 + $0x10] sm:$0xff]
  %v49 = vld [vmem:[%s2 + $0x18] sm:$0xff]
  %v50 = vld [vmem:[%s2 + $0x20] sm:$0xff]
  %v51 = vld [vmem:[%s2 + $0x28] sm:$0xff]
  %v52 = vld [vmem:[%s2 + $0x30] sm:$0xff]
  %v53 = vld [vmem:[%s2 + $0x38] sm:$0xff]
  %v54 = vld [vmem:[%s2 + $0x40] sm:$0xff]
  %v55 = vld [vmem:[%s2 + $0x48] sm:$0xff]
  %v56 = vld [vmem:[%s2 + $0x50] sm:$0xff]
  %v57 = vld [vmem:[%s2 + $0x58] sm:$0xff]
  %v58 = vld [vmem:[%s2 + $0x60] sm:$0xff]
  %v59 = vld [vmem:[%s2 + $0x68] sm:$0xff]
  %v60 = vld [vmem:[%s2 + $0x70] sm:$0xff]
  %v61 = vld [vmem:[%s2 + $0x78] sm:$0xff]
  %v62 = vld [vmem:[%s1] sm:$0xff]
  %v63 = vld [vmem:[%s1 + $0x8] sm:$0xff]
  %v64 = vld [vmem:[%s1 + $0x10] sm:$0xff]
  %v65 = vld [vmem:[%s1 + $0x18] sm:$0xff]
  %v66 = vld [vmem:[%s1 + $0x20] sm:$0xff]
  %v67 = vld [vmem:[%s1 + $0x28] sm:$0xff]
  %v68 = vld [vmem:[%s1 + $0x30] sm:$0xff]
  %v69 = vld [vmem:[%s1 + $0x38] sm:$0xff]
  %v70 = vld [vmem:[%s1 + $0x40] sm:$0xff]
  %v71 = vld [vmem:[%s1 + $0x48] sm:$0xff]
  %v72 = vld [vmem:[%s1 + $0x50] sm:$0xff]
  %v73 = vld [vmem:[%s1 + $0x58] sm:$0xff]
  %v74 = vld [vmem:[%s1 + $0x60] sm:$0xff]
  %v75 = vld [vmem:[%s1 + $0x68] sm:$0xff]
  %v76 = vld [vmem:[%s1 + $0x70] sm:$0xff]
  %v77 = vld [vmem:[%s1 + $0x78] sm:$0xff]
  %v78 = vld [vmem:[%s3] sm:$0x1]
  %v80 = vlaneseq
  %v81 = vshrl.u32 %v80, 7
  %v82 = vsub.s32 0, %v81
  %v83 = vrot.slane %v78, %v82
  %85 = vmatprep.subr.mxu0 0.0
  %86 = vmatpush1.msra.mxu0 %v62
  %87 = vmatprep.subr.mxu0 0.0
  %88 = vmatpush1.msra.mxu0 %v63
  %89 = vmatprep.subr.mxu0 0.0
  %90 = vmatpush1.msra.mxu0 %v64
  %91 = vmatprep.subr.mxu0 0.0
  %92 = vmatpush1.msra.mxu0 %v65
  %93 = vmatprep.subr.mxu0 0.0
  %94 = vmatpush1.msra.mxu0 %v66
  %95 = vmatprep.subr.mxu0 0.0
  %96 = vmatpush1.msra.mxu0 %v67
  %97 = vmatprep.subr.mxu0 0.0
  %98 = vmatpush1.msra.mxu0 %v68
  %99 = vmatprep.subr.mxu0 0.0
  %100 = vmatpush1.msra.mxu0 %v69
  %101 = vmatprep.subr.mxu0 0.0
  %102 = vmatpush1.msra.mxu0 %v70
  %103 = vmatprep.subr.mxu0 0.0
  %104 = vmatpush1.msra.mxu0 %v71
  %105 = vmatprep.subr.mxu0 0.0
  %106 = vmatpush1.msra.mxu0 %v72
  %107 = vmatprep.subr.mxu0 0.0
  %108 = vmatpush1.msra.mxu0 %v73
  %109 = vmatprep.subr.mxu0 0.0
  %110 = vmatpush1.msra.mxu0 %v74
  %111 = vmatprep.subr.mxu0 0.0
  %112 = vmatpush1.msra.mxu0 %v75
  %113 = vmatprep.subr.mxu0 0.0
  %114 = vmatpush1.msra.mxu0 %v76
  %115 = vmatprep.subr.mxu0 0.0
  %116 = vmatpush1.msra.mxu0 %v77
  %117 = vmatprep.subr.mxu0 0.0
  %118 = vmatpush1.msra.mxu0 0.0
  %119 = vmatprep.subr.mxu0 0.0
  %120 = vmatpush1.msra.mxu0 0.0
  %121 = vmatprep.subr.mxu0 0.0
  %122 = vmatpush1.msra.mxu0 0.0
  %123 = vmatprep.subr.mxu0 0.0
  %124 = vmatpush1.msra.mxu0 0.0
  %125 = vmatprep.subr.mxu0 0.0
  %126 = vmatpush1.msra.mxu0 0.0
  %127 = vmatprep.subr.mxu0 0.0
  %128 = vmatpush1.msra.mxu0 0.0
  %129 = vmatprep.subr.mxu0 0.0
  %130 = vmatpush1.msra.mxu0 0.0
  %131 = vmatprep.subr.mxu0 0.0
  %132 = vmatpush1.msra.mxu0 0.0
  %133 = vmatprep.subr.mxu0 0.0
  %134 = vmatpush1.msra.mxu0 0.0
  %135 = vmatprep.subr.mxu0 0.0
  %136 = vmatpush1.msra.mxu0 0.0
  %137 = vmatprep.subr.mxu0 0.0
  %138 = vmatpush1.msra.mxu0 0.0
  %139 = vmatprep.subr.mxu0 0.0
  %140 = vmatpush1.msra.mxu0 0.0
  %141 = vmatprep.subr.mxu0 0.0
  %142 = vmatpush1.msra.mxu0 0.0
  %143 = vmatprep.subr.mxu0 0.0
  %144 = vmatpush1.msra.mxu0 0.0
  %145 = vmatprep.subr.mxu0 0.0
  %146 = vmatpush1.msra.mxu0 0.0
  %147 = vmatprep.subr.mxu0 0.0
  %148 = vmatpush1.msra.mxu0 0.0
  %149 = vmatprep.mubr.f32.mxu0 0.0
  %150 = vmatmul.mubr.f32.gmra.mrb[0].mxu0 %v38
  %v151 = vpop.f32.mrb[0].mxu0
  %v152 = vadd.f32 %v83, %v151
  %v153 = vpop.f32.mrb[0].mxu0
  %154 = vmatprep.mubr.f32.mxu0 0.0
  %155 = vmatmul.mubr.f32.gmra.mrb[0].mxu0 %v39
  %v156 = vpop.f32.mrb[0].mxu0
  %v157 = vadd.f32 %v83, %v156
  %v158 = vpop.f32.mrb[0].mxu0
  %159 = vmatprep.mubr.f32.mxu0 0.0
  %160 = vmatmul.mubr.f32.gmra.mrb[0].mxu0 %v40
  %v161 = vpop.f32.mrb[0].mxu0
  %v162 = vadd.f32 %v83, %v161
  %v163 = vpop.f32.mrb[0].mxu0
  %164 = vmatprep.mubr.f32.mxu0 0.0
  %165 = vmatmul.mubr.f32.gmra.mrb[0].mxu0 %v41
  %v166 = vpop.f32.mrb[0].mxu0
  %v167 = vadd.f32 %v83, %v166
  %v168 = vpop.f32.mrb[0].mxu0
  %169 = vmatprep.mubr.f32.mxu0 0.0
  %170 = vmatmul.mubr.f32.gmra.mrb[0].mxu0 %v42
  %v171 = vpop.f32.mrb[0].mxu0
  %v172 = vadd.f32 %v83, %v171
  %v173 = vpop.f32.mrb[0].mxu0
  %174 = vmatprep.mubr.f32.mxu0 0.0
  %175 = vmatmul.mubr.f32.gmra.mrb[0].mxu0 %v43
  %v176 = vpop.f32.mrb[0].mxu0
  %v177 = vadd.f32 %v83, %v176
  %v178 = vpop.f32.mrb[0].mxu0
  %179 = vmatprep.mubr.f32.mxu0 0.0
  %180 = vmatmul.mubr.f32.gmra.mrb[0].mxu0 %v44
  %v181 = vpop.f32.mrb[0].mxu0
  %v182 = vadd.f32 %v83, %v181
  %v183 = vpop.f32.mrb[0].mxu0
  %184 = vmatprep.mubr.f32.mxu0 0.0
  %185 = vmatmul.mubr.f32.gmra.mrb[0].mxu0 %v45
  %v186 = vpop.f32.mrb[0].mxu0
  %v187 = vadd.f32 %v83, %v186
  %v188 = vpop.f32.mrb[0].mxu0
  %189 = vdwg.mxu0
  %190 = vst [vmem:[#allocation2] sm:$0xff] %v152
  %191 = vst [vmem:[#allocation2 + $0x8] sm:$0xff] %v157
  %192 = vst [vmem:[#allocation2 + $0x10] sm:$0xff] %v162
  %193 = vst [vmem:[#allocation2 + $0x18] sm:$0xff] %v167
  %194 = vst [vmem:[#allocation2 + $0x20] sm:$0xff] %v172
  %195 = vst [vmem:[#allocation2 + $0x28] sm:$0xff] %v177
  %196 = vst [vmem:[#allocation2 + $0x30] sm:$0xff] %v182
  %197 = vst [vmem:[#allocation2 + $0x38] sm:$0xff] %v187
  %v198 = vld [vmem:[#allocation2] sm:$0xff]
  %199 = vmatprep.subr.mxu0 0.0
  %200 = vmatpush1.msra.mxu0 %v46
  %201 = vmatprep.subr.mxu0 0.0
  %202 = vmatpush1.msra.mxu0 %v47
  %203 = vmatprep.subr.mxu0 0.0
  %204 = vmatpush1.msra.mxu0 %v48
  %205 = vmatprep.subr.mxu0 0.0
  %206 = vmatpush1.msra.mxu0 %v49
  %207 = vmatprep.subr.mxu0 0.0
  %208 = vmatpush1.msra.mxu0 %v50
  %209 = vmatprep.subr.mxu0 0.0
  %210 = vmatpush1.msra.mxu0 %v51
  %211 = vmatprep.subr.mxu0 0.0
  %212 = vmatpush1.msra.mxu0 %v52
  %213 = vmatprep.subr.mxu0 0.0
  %214 = vmatpush1.msra.mxu0 %v53
  %215 = vmatprep.subr.mxu0 0.0
  %216 = vmatpush1.msra.mxu0 %v54
  %217 = vmatprep.subr.mxu0 0.0
  %218 = vmatpush1.msra.mxu0 %v55
  %219 = vmatprep.subr.mxu0 0.0
  %220 = vmatpush1.msra.mxu0 %v56
  %221 = vmatprep.subr.mxu0 0.0
  %222 = vmatpush1.msra.mxu0 %v57
  %223 = vmatprep.subr.mxu0 0.0
  %224 = vmatpush1.msra.mxu0 %v58
  %225 = vmatprep.subr.mxu0 0.0
  %226 = vmatpush1.msra.mxu0 %v59
  %227 = vmatprep.subr.mxu0 0.0
  %228 = vmatpush1.msra.mxu0 %v60
  %229 = vmatprep.subr.mxu0 0.0
  %230 = vmatpush1.msra.mxu0 %v61
  %231 = vmatprep.subr.mxu0 0.0
  %232 = vmatpush1.msra.mxu0 0.0
  %233 = vmatprep.subr.mxu0 0.0
  %234 = vmatpush1.msra.mxu0 0.0
  %235 = vmatprep.subr.mxu0 0.0
  %236 = vmatpush1.msra.mxu0 0.0
  %237 = vmatprep.subr.mxu0 0.0
  %238 = vmatpush1.msra.mxu0 0.0
  %239 = vmatprep.subr.mxu0 0.0
  %240 = vmatpush1.msra.mxu0 0.0
  %241 = vmatprep.subr.mxu0 0.0
  %242 = vmatpush1.msra.mxu0 0.0
  %243 = vmatprep.subr.mxu0 0.0
  %244 = vmatpush1.msra.mxu0 0.0
  %245 = vmatprep.subr.mxu0 0.0
  %246 = vmatpush1.msra.mxu0 0.0
  %247 = vmatprep.subr.mxu0 0.0
  %248 = vmatpush1.msra.mxu0 0.0
  %249 = vmatprep.subr.mxu0 0.0
  %250 = vmatpush1.msra.mxu0 0.0
  %251 = vmatprep.subr.mxu0 0.0
  %252 = vmatpush1.msra.mxu0 0.0
  %253 = vmatprep.subr.mxu0 0.0
  %254 = vmatpush1.msra.mxu0 0.0
  %255 = vmatprep.subr.mxu0 0.0
  %256 = vmatpush1.msra.mxu0 0.0
  %257 = vmatprep.subr.mxu0 0.0
  %258 = vmatpush1.msra.mxu0 0.0
  %259 = vmatprep.subr.mxu0 0.0
  %260 = vmatpush1.msra.mxu0 0.0
  %261 = vmatprep.subr.mxu0 0.0
  %262 = vmatpush1.msra.mxu0 0.0
  %263 = vmatprep.mubr.f32.mxu0 0.0
  %264 = vmatmul.mubr.f32.gmra.mrb[0].mxu0 0.0
  %v265 = vpop.f32.mrb[0].mxu0
  %v266 = vadd.f32 0.0, %v265
  %v267 = vpop.f32.mrb[0].mxu0
  %268 = vdwg.mxu0
  %v269 = vadd.f32 %v198, %v266
  %v270 = vtanh.pop %v269
  %271 = vst [vmem:[#allocation2] sm:$0xff] %v270
  %s272 = scalar_lea.vmem [#allocation2], 8
  %v273 = vld [vmem:[%s272] sm:$0xff]
  %274 = vmatprep.subr.mxu0 0.0
  %275 = vmatpush1.msra.mxu0 %v46
  %276 = vmatprep.subr.mxu0 0.0
  %277 = vmatpush1.msra.mxu0 %v47
  %278 = vmatprep.subr.mxu0 0.0
  %279 = vmatpush1.msra.mxu0 %v48
  %280 = vmatprep.subr.mxu0 0.0
  %281 = vmatpush1.msra.mxu0 %v49
  %282 = vmatprep.subr.mxu0 0.0
  %283 = vmatpush1.msra.mxu0 %v50
  %284 = vmatprep.subr.mxu0 0.0
  %285 = vmatpush1.msra.mxu0 %v51
  %286 = vmatprep.subr.mxu0 0.0
  %287 = vmatpush1.msra.mxu0 %v52
  %288 = vmatprep.subr.mxu0 0.0
  %289 = vmatpush1.msra.mxu0 %v53
  %290 = vmatprep.subr.mxu0 0.0
  %291 = vmatpush1.msra.mxu0 %v54
  %292 = vmatprep.subr.mxu0 0.0
  %293 = vmatpush1.msra.mxu0 %v55
  %294 = vmatprep.subr.mxu0 0.0
  %295 = vmatpush1.msra.mxu0 %v56
  %296 = vmatprep.subr.mxu0 0.0
  %297 = vmatpush1.msra.mxu0 %v57
  %298 = vmatprep.subr.mxu0 0.0
  %299 = vmatpush1.msra.mxu0 %v58
  %300 = vmatprep.subr.mxu0 0.0
  %301 = vmatpush1.msra.mxu0 %v59
  %302 = vmatprep.subr.mxu0 0.0
  %303 = vmatpush1.msra.mxu0 %v60
  %304 = vmatprep.subr.mxu0 0.0
  %305 = vmatpush1.msra.mxu0 %v61
  %306 = vmatprep.subr.mxu0 0.0
  %307 = vmatpush1.msra.mxu0 0.0
  %308 = vmatprep.subr.mxu0 0.0
  %309 = vmatpush1.msra.mxu0 0.0
  %310 = vmatprep.subr.mxu0 0.0
  %311 = vmatpush1.msra.mxu0 0.0
  %312 = vmatprep.subr.mxu0 0.0
  %313 = vmatpush1.msra.mxu0 0.0
  %314 = vmatprep.subr.mxu0 0.0
  %315 = vmatpush1.msra.mxu0 0.0
  %316 = vmatprep.subr.mxu0 0.0
  %317 = vmatpush1.msra.mxu0 0.0
  %318 = vmatprep.subr.mxu0 0.0
  %319 = vmatpush1.msra.mxu0 0.0
  %320 = vmatprep.subr.mxu0 0.0
  %321 = vmatpush1.msra.mxu0 0.0
  %322 = vmatprep.subr.mxu0 0.0
  %323 = vmatpush1.msra.mxu0 0.0
  %324 = vmatprep.subr.mxu0 0.0
  %325 = vmatpush1.msra.mxu0 0.0
  %326 = vmatprep.subr.mxu0 0.0
  %327 = vmatpush1.msra.mxu0 0.0
  %328 = vmatprep.subr.mxu0 0.0
  %329 = vmatpush1.msra.mxu0 0.0
  %330 = vmatprep.subr.mxu0 0.0
  %331 = vmatpush1.msra.mxu0 0.0
  %332 = vmatprep.subr.mxu0 0.0
  %333 = vmatpush1.msra.mxu0 0.0
  %334 = vmatprep.subr.mxu0 0.0
  %335 = vmatpush1.msra.mxu0 0.0
  %336 = vmatprep.subr.mxu0 0.0
  %337 = vmatpush1.msra.mxu0 0.0
  %338 = vmatprep.mubr.f32.mxu0 0.0
  %339 = vmatmul.mubr.f32.gmra.mrb[0].mxu0 %v270
  %v340 = vpop.f32.mrb[0].mxu0
  %v341 = vadd.f32 0.0, %v340
  %v342 = vpop.f32.mrb[0].mxu0
  %343 = vdwg.mxu0
  %v344 = vadd.f32 %v273, %v341
  %v345 = vtanh.pop %v344
  %346 = vst [vmem:[%s272] sm:$0xff] %v345
  %s347 = scalar_lea.vmem [#allocation2], 16
  %v348 = vld [vmem:[%s347] sm:$0xff]
  %349 = vmatprep.subr.mxu0 0.0
  %350 = vmatpush1.msra.mxu0 %v46
  %351 = vmatprep.subr.mxu0 0.0
  %352 = vmatpush1.msra.mxu0 %v47
  %353 = vmatprep.subr.mxu0 0.0
  %354 = vmatpush1.msra.mxu0 %v48
  %355 = vmatprep.subr.mxu0 0.0
  %356 = vmatpush1.msra.mxu0 %v49
  %357 = vmatprep.subr.mxu0 0.0
  %358 = vmatpush1.msra.mxu0 %v50
  %359 = vmatprep.subr.mxu0 0.0
  %360 = vmatpush1.msra.mxu0 %v51
  %361 = vmatprep.subr.mxu0 0.0
  %362 = vmatpush1.msra.mxu0 %v52
  %363 = vmatprep.subr.mxu0 0.0
  %364 = vmatpush1.msra.mxu0 %v53
  %365 = vmatprep.subr.mxu0 0.0
  %366 = vmatpush1.msra.mxu0 %v54
  %367 = vmatprep.subr.mxu0 0.0
  %368 = vmatpush1.msra.mxu0 %v55
  %369 = vmatprep.subr.mxu0 0.0
  %370 = vmatpush1.msra.mxu0 %v56
  %371 = vmatprep.subr.mxu0 0.0
  %372 = vmatpush1.msra.mxu0 %v57
  %373 = vmatprep.subr.mxu0 0.0
  %374 = vmatpush1.msra.mxu0 %v58
  %375 = vmatprep.subr.mxu0 0.0
  %376 = vmatpush1.msra.mxu0 %v59
  %377 = vmatprep.subr.mxu0 0.0
  %378 = vmatpush1.msra.mxu0 %v60
  %379 = vmatprep.subr.mxu0 0.0
  %380 = vmatpush1.msra.mxu0 %v61
  %381 = vmatprep.subr.mxu0 0.0
  %382 = vmatpush1.msra.mxu0 0.0
  %383 = vmatprep.subr.mxu0 0.0
  %384 = vmatpush1.msra.mxu0 0.0
  %385 = vmatprep.subr.mxu0 0.0
  %386 = vmatpush1.msra.mxu0 0.0
  %387 = vmatprep.subr.mxu0 0.0
  %388 = vmatpush1.msra.mxu0 0.0
  %389 = vmatprep.subr.mxu0 0.0
  %390 = vmatpush1.msra.mxu0 0.0
  %391 = vmatprep.subr.mxu0 0.0
  %392 = vmatpush1.msra.mxu0 0.0
  %393 = vmatprep.subr.mxu0 0.0
  %394 = vmatpush1.msra.mxu0 0.0
  %395 = vmatprep.subr.mxu0 0.0
  %396 = vmatpush1.msra.mxu0 0.0
  %397 = vmatprep.subr.mxu0 0.0
  %398 = vmatpush1.msra.mxu0 0.0
  %399 = vmatprep.subr.mxu0 0.0
  %400 = vmatpush1.msra.mxu0 0.0
  %401 = vmatprep.subr.mxu0 0.0
  %402 = vmatpush1.msra.mxu0 0.0
  %403 = vmatprep.subr.mxu0 0.0
  %404 = vmatpush1.msra.mxu0 0.0
  %405 = vmatprep.subr.mxu0 0.0
  %406 = vmatpush1.msra.mxu0 0.0
  %407 = vmatprep.subr.mxu0 0.0
  %408 = vmatpush1.msra.mxu0 0.0
  %409 = vmatprep.subr.mxu0 0.0
  %410 = vmatpush1.msra.mxu0 0.0
  %411 = vmatprep.subr.mxu0 0.0
  %412 = vmatpush1.msra.mxu0 0.0
  %413 = vmatprep.mubr.f32.mxu0 0.0
  %414 = vmatmul.mubr.f32.gmra.mrb[0].mxu0 %v345
  %v415 = vpop.f32.mrb[0].mxu0
  %v416 = vadd.f32 0.0, %v415
  %v417 = vpop.f32.mrb[0].mxu0
  %418 = vdwg.mxu0
  %v419 = vadd.f32 %v348, %v416
  %v420 = vtanh.pop %v419
  %421 = vst [vmem:[%s347] sm:$0xff] %v420
  %s422 = scalar_lea.vmem [#allocation2], 24
  %v423 = vld [vmem:[%s422] sm:$0xff]
  %424 = vmatprep.subr.mxu0 0.0
  %425 = vmatpush1.msra.mxu0 %v46
  %426 = vmatprep.subr.mxu0 0.0
  %427 = vmatpush1.msra.mxu0 %v47
  %428 = vmatprep.subr.mxu0 0.0
  %429 = vmatpush1.msra.mxu0 %v48
  %430 = vmatprep.subr.mxu0 0.0
  %431 = vmatpush1.msra.mxu0 %v49
  %432 = vmatprep.subr.mxu0 0.0
  %433 = vmatpush1.msra.mxu0 %v50
  %434 = vmatprep.subr.mxu0 0.0
  %435 = vmatpush1.msra.mxu0 %v51
  %436 = vmatprep.subr.mxu0 0.0
  %437 = vmatpush1.msra.mxu0 %v52
  %438 = vmatprep.subr.mxu0 0.0
  %439 = vmatpush1.msra.mxu0 %v53
  %440 = vmatprep.subr.mxu0 0.0
  %441 = vmatpush1.msra.mxu0 %v54
  %442 = vmatprep.subr.mxu0 0.0
  %443 = vmatpush1.msra.mxu0 %v55
  %444 = vmatprep.subr.mxu0 0.0
  %445 = vmatpush1.msra.mxu0 %v56
  %446 = vmatprep.subr.mxu0 0.0
  %447 = vmatpush1.msra.mxu0 %v57
  %448 = vmatprep.subr.mxu0 0.0
  %449 = vmatpush1.msra.mxu0 %v58
  %450 = vmatprep.subr.mxu0 0.0
  %451 = vmatpush1.msra.mxu0 %v59
  %452 = vmatprep.subr.mxu0 0.0
  %453 = vmatpush1.msra.mxu0 %v60
  %454 = vmatprep.subr.mxu0 0.0
  %455 = vmatpush1.msra.mxu0 %v61
  %456 = vmatprep.subr.mxu0 0.0
  %457 = vmatpush1.msra.mxu0 0.0
  %458 = vmatprep.subr.mxu0 0.0
  %459 = vmatpush1.msra.mxu0 0.0
  %460 = vmatprep.subr.mxu0 0.0
  %461 = vmatpush1.msra.mxu0 0.0
  %462 = vmatprep.subr.mxu0 0.0
  %463 = vmatpush1.msra.mxu0 0.0
  %464 = vmatprep.subr.mxu0 0.0
  %465 = vmatpush1.msra.mxu0 0.0
  %466 = vmatprep.subr.mxu0 0.0
  %467 = vmatpush1.msra.mxu0 0.0
  %468 = vmatprep.subr.mxu0 0.0
  %469 = vmatpush1.msra.mxu0 0.0
  %470 = vmatprep.subr.mxu0 0.0
  %471 = vmatpush1.msra.mxu0 0.0
  %472 = vmatprep.subr.mxu0 0.0
  %473 = vmatpush1.msra.mxu0 0.0
  %474 = vmatprep.subr.mxu0 0.0
  %475 = vmatpush1.msra.mxu0 0.0
  %476 = vmatprep.subr.mxu0 0.0
  %477 = vmatpush1.msra.mxu0 0.0
  %478 = vmatprep.subr.mxu0 0.0
  %479 = vmatpush1.msra.mxu0 0.0
  %480 = vmatprep.subr.mxu0 0.0
  %481 = vmatpush1.msra.mxu0 0.0
  %482 = vmatprep.subr.mxu0 0.0
  %483 = vmatpush1.msra.mxu0 0.0
  %484 = vmatprep.subr.mxu0 0.0
  %485 = vmatpush1.msra.mxu0 0.0
  %486 = vmatprep.subr.mxu0 0.0
  %487 = vmatpush1.msra.mxu0 0.0
  %488 = vmatprep.mubr.f32.mxu0 0.0
  %489 = vmatmul.mubr.f32.gmra.mrb[0].mxu0 %v420
  %v490 = vpop.f32.mrb[0].mxu0
  %v491 = vadd.f32 0.0, %v490
  %v492 = vpop.f32.mrb[0].mxu0
  %493 = vdwg.mxu0
  %v494 = vadd.f32 %v423, %v491
  %v495 = vtanh.pop %v494
  %496 = vst [vmem:[%s422] sm:$0xff] %v495
  %s497 = scalar_lea.vmem [#allocation2], 32
  %v498 = vld [vmem:[%s497] sm:$0xff]
  %499 = vmatprep.subr.mxu0 0.0
  %500 = vmatpush1.msra.mxu0 %v46
  %501 = vmatprep.subr.mxu0 0.0
  %502 = vmatpush1.msra.mxu0 %v47
  %503 = vmatprep.subr.mxu0 0.0
  %504 = vmatpush1.msra.mxu0 %v48
  %505 = vmatprep.subr.mxu0 0.0
  %506 = vmatpush1.msra.mxu0 %v49
  %507 = vmatprep.subr.mxu0 0.0
  %508 = vmatpush1.msra.mxu0 %v50
  %509 = vmatprep.subr.mxu0 0.0
  %510 = vmatpush1.msra.mxu0 %v51
  %511 = vmatprep.subr.mxu0 0.0
  %512 = vmatpush1.msra.mxu0 %v52
  %513 = vmatprep.subr.mxu0 0.0
  %514 = vmatpush1.msra.mxu0 %v53
  %515 = vmatprep.subr.mxu0 0.0
  %516 = vmatpush1.msra.mxu0 %v54
  %517 = vmatprep.subr.mxu0 0.0
  %518 = vmatpush1.msra.mxu0 %v55
  %519 = vmatprep.subr.mxu0 0.0
  %520 = vmatpush1.msra.mxu0 %v56
  %521 = vmatprep.subr.mxu0 0.0
  %522 = vmatpush1.msra.mxu0 %v57
  %523 = vmatprep.subr.mxu0 0.0
  %524 = vmatpush1.msra.mxu0 %v58
  %525 = vmatprep.subr.mxu0 0.0
  %526 = vmatpush1.msra.mxu0 %v59
  %527 = vmatprep.subr.mxu0 0.0
  %528 = vmatpush1.msra.mxu0 %v60
  %529 = vmatprep.subr.mxu0 0.0
  %530 = vmatpush1.msra.mxu0 %v61
  %531 = vmatprep.subr.mxu0 0.0
  %532 = vmatpush1.msra.mxu0 0.0
  %533 = vmatprep.subr.mxu0 0.0
  %534 = vmatpush1.msra.mxu0 0.0
  %535 = vmatprep.subr.mxu0 0.0
  %536 = vmatpush1.msra.mxu0 0.0
  %537 = vmatprep.subr.mxu0 0.0
  %538 = vmatpush1.msra.mxu0 0.0
  %539 = vmatprep.subr.mxu0 0.0
  %540 = vmatpush1.msra.mxu0 0.0
  %541 = vmatprep.subr.mxu0 0.0
  %542 = vmatpush1.msra.mxu0 0.0
  %543 = vmatprep.subr.mxu0 0.0
  %544 = vmatpush1.msra.mxu0 0.0
  %545 = vmatprep.subr.mxu0 0.0
  %546 = vmatpush1.msra.mxu0 0.0
  %547 = vmatprep.subr.mxu0 0.0
  %548 = vmatpush1.msra.mxu0 0.0
  %549 = vmatprep.subr.mxu0 0.0
  %550 = vmatpush1.msra.mxu0 0.0
  %551 = vmatprep.subr.mxu0 0.0
  %552 = vmatpush1.msra.mxu0 0.0
  %553 = vmatprep.subr.mxu0 0.0
  %554 = vmatpush1.msra.mxu0 0.0
  %555 = vmatprep.subr.mxu0 0.0
  %556 = vmatpush1.msra.mxu0 0.0
  %557 = vmatprep.subr.mxu0 0.0
  %558 = vmatpush1.msra.mxu0 0.0
  %559 = vmatprep.subr.mxu0 0.0
  %560 = vmatpush1.msra.mxu0 0.0
  %561 = vmatprep.subr.mxu0 0.0
  %562 = vmatpush1.msra.mxu0 0.0
  %563 = vmatprep.mubr.f32.mxu0 0.0
  %564 = vmatmul.mubr.f32.gmra.mrb[0].mxu0 %v495
  %v565 = vpop.f32.mrb[0].mxu0
  %v566 = vadd.f32 0.0, %v565
  %v567 = vpop.f32.mrb[0].mxu0
  %568 = vdwg.mxu0
  %v569 = vadd.f32 %v498, %v566
  %v570 = vtanh.pop %v569
  %571 = vst [vmem:[%s497] sm:$0xff] %v570
  %s572 = scalar_lea.vmem [#allocation2], 40
  %v573 = vld [vmem:[%s572] sm:$0xff]
  %574 = vmatprep.subr.mxu0 0.0
  %575 = vmatpush1.msra.mxu0 %v46
  %576 = vmatprep.subr.mxu0 0.0
  %577 = vmatpush1.msra.mxu0 %v47
  %578 = vmatprep.subr.mxu0 0.0
  %579 = vmatpush1.msra.mxu0 %v48
  %580 = vmatprep.subr.mxu0 0.0
  %581 = vmatpush1.msra.mxu0 %v49
  %582 = vmatprep.subr.mxu0 0.0
  %583 = vmatpush1.msra.mxu0 %v50
  %584 = vmatprep.subr.mxu0 0.0
  %585 = vmatpush1.msra.mxu0 %v51
  %586 = vmatprep.subr.mxu0 0.0
  %587 = vmatpush1.msra.mxu0 %v52
  %588 = vmatprep.subr.mxu0 0.0
  %589 = vmatpush1.msra.mxu0 %v53
  %590 = vmatprep.subr.mxu0 0.0
  %591 = vmatpush1.msra.mxu0 %v54
  %592 = vmatprep.subr.mxu0 0.0
  %593 = vmatpush1.msra.mxu0 %v55
  %594 = vmatprep.subr.mxu0 0.0
  %595 = vmatpush1.msra.mxu0 %v56
  %596 = vmatprep.subr.mxu0 0.0
  %597 = vmatpush1.msra.mxu0 %v57
  %598 = vmatprep.subr.mxu0 0.0
  %599 = vmatpush1.msra.mxu0 %v58
  %600 = vmatprep.subr.mxu0 0.0
  %601 = vmatpush1.msra.mxu0 %v59
  %602 = vmatprep.subr.mxu0 0.0
  %603 = vmatpush1.msra.mxu0 %v60
  %604 = vmatprep.subr.mxu0 0.0
  %605 = vmatpush1.msra.mxu0 %v61
  %606 = vmatprep.subr.mxu0 0.0
  %607 = vmatpush1.msra.mxu0 0.0
  %608 = vmatprep.subr.mxu0 0.0
  %609 = vmatpush1.msra.mxu0 0.0
  %610 = vmatprep.subr.mxu0 0.0
  %611 = vmatpush1.msra.mxu0 0.0
  %612 = vmatprep.subr.mxu0 0.0
  %613 = vmatpush1.msra.mxu0 0.0
  %614 = vmatprep.subr.mxu0 0.0
  %615 = vmatpush1.msra.mxu0 0.0
  %616 = vmatprep.subr.mxu0 0.0
  %617 = vmatpush1.msra.mxu0 0.0
  %618 = vmatprep.subr.mxu0 0.0
  %619 = vmatpush1.msra.mxu0 0.0
  %620 = vmatprep.subr.mxu0 0.0
  %621 = vmatpush1.msra.mxu0 0.0
  %622 = vmatprep.subr.mxu0 0.0
  %623 = vmatpush1.msra.mxu0 0.0
  %624 = vmatprep.subr.mxu0 0.0
  %625 = vmatpush1.msra.mxu0 0.0
  %626 = vmatprep.subr.mxu0 0.0
  %627 = vmatpush1.msra.mxu0 0.0
  %628 = vmatprep.subr.mxu0 0.0
  %629 = vmatpush1.msra.mxu0 0.0
  %630 = vmatprep.subr.mxu0 0.0
  %631 = vmatpush1.msra.mxu0 0.0
  %632 = vmatprep.subr.mxu0 0.0
  %633 = vmatpush1.msra.mxu0 0.0
  %634 = vmatprep.subr.mxu0 0.0
  %635 = vmatpush1.msra.mxu0 0.0
  %636 = vmatprep.subr.mxu0 0.0
  %637 = vmatpush1.msra.mxu0 0.0
  %638 = vmatprep.mubr.f32.mxu0 0.0
  %639 = vmatmul.mubr.f32.gmra.mrb[0].mxu0 %v570
  %v640 = vpop.f32.mrb[0].mxu0
  %v641 = vadd.f32 0.0, %v640
  %v642 = vpop.f32.mrb[0].mxu0
  %643 = vdwg.mxu0
  %v644 = vadd.f32 %v573, %v641
  %v645 = vtanh.pop %v644
  %646 = vst [vmem:[%s572] sm:$0xff] %v645
  %s647 = scalar_lea.vmem [#allocation2], 48
  %v648 = vld [vmem:[%s647] sm:$0xff]
  %649 = vmatprep.subr.mxu0 0.0
  %650 = vmatpush1.msra.mxu0 %v46
  %651 = vmatprep.subr.mxu0 0.0
  %652 = vmatpush1.msra.mxu0 %v47
  %653 = vmatprep.subr.mxu0 0.0
  %654 = vmatpush1.msra.mxu0 %v48
  %655 = vmatprep.subr.mxu0 0.0
  %656 = vmatpush1.msra.mxu0 %v49
  %657 = vmatprep.subr.mxu0 0.0
  %658 = vmatpush1.msra.mxu0 %v50
  %659 = vmatprep.subr.mxu0 0.0
  %660 = vmatpush1.msra.mxu0 %v51
  %661 = vmatprep.subr.mxu0 0.0
  %662 = vmatpush1.msra.mxu0 %v52
  %663 = vmatprep.subr.mxu0 0.0
  %664 = vmatpush1.msra.mxu0 %v53
  %665 = vmatprep.subr.mxu0 0.0
  %666 = vmatpush1.msra.mxu0 %v54
  %667 = vmatprep.subr.mxu0 0.0
  %668 = vmatpush1.msra.mxu0 %v55
  %669 = vmatprep.subr.mxu0 0.0
  %670 = vmatpush1.msra.mxu0 %v56
  %671 = vmatprep.subr.mxu0 0.0
  %672 = vmatpush1.msra.mxu0 %v57
  %673 = vmatprep.subr.mxu0 0.0
  %674 = vmatpush1.msra.mxu0 %v58
  %675 = vmatprep.subr.mxu0 0.0
  %676 = vmatpush1.msra.mxu0 %v59
  %677 = vmatprep.subr.mxu0 0.0
  %678 = vmatpush1.msra.mxu0 %v60
  %679 = vmatprep.subr.mxu0 0.0
  %680 = vmatpush1.msra.mxu0 %v61
  %681 = vmatprep.subr.mxu0 0.0
  %682 = vmatpush1.msra.mxu0 0.0
  %683 = vmatprep.subr.mxu0 0.0
  %684 = vmatpush1.msra.mxu0 0.0
  %685 = vmatprep.subr.mxu0 0.0
  %686 = vmatpush1.msra.mxu0 0.0
  %687 = vmatprep.subr.mxu0 0.0
  %688 = vmatpush1.msra.mxu0 0.0
  %689 = vmatprep.subr.mxu0 0.0
  %690 = vmatpush1.msra.mxu0 0.0
  %691 = vmatprep.subr.mxu0 0.0
  %692 = vmatpush1.msra.mxu0 0.0
  %693 = vmatprep.subr.mxu0 0.0
  %694 = vmatpush1.msra.mxu0 0.0
  %695 = vmatprep.subr.mxu0 0.0
  %696 = vmatpush1.msra.mxu0 0.0
  %697 = vmatprep.subr.mxu0 0.0
  %698 = vmatpush1.msra.mxu0 0.0
  %699 = vmatprep.subr.mxu0 0.0
  %700 = vmatpush1.msra.mxu0 0.0
  %701 = vmatprep.subr.mxu0 0.0
  %702 = vmatpush1.msra.mxu0 0.0
  %703 = vmatprep.subr.mxu0 0.0
  %704 = vmatpush1.msra.mxu0 0.0
  %705 = vmatprep.subr.mxu0 0.0
  %706 = vmatpush1.msra.mxu0 0.0
  %707 = vmatprep.subr.mxu0 0.0
  %708 = vmatpush1.msra.mxu0 0.0
  %709 = vmatprep.subr.mxu0 0.0
  %710 = vmatpush1.msra.mxu0 0.0
  %711 = vmatprep.subr.mxu0 0.0
  %712 = vmatpush1.msra.mxu0 0.0
  %713 = vmatprep.mubr.f32.mxu0 0.0
  %714 = vmatmul.mubr.f32.gmra.mrb[0].mxu0 %v645
  %v715 = vpop.f32.mrb[0].mxu0
  %v716 = vadd.f32 0.0, %v715
  %v717 = vpop.f32.mrb[0].mxu0
  %718 = vdwg.mxu0
  %v719 = vadd.f32 %v648, %v716
  %v720 = vtanh.pop %v719
  %721 = vst [vmem:[%s647] sm:$0xff] %v720
  %s722 = scalar_lea.vmem [#allocation2], 56
  %v723 = vld [vmem:[%s722] sm:$0xff]
  %724 = vmatprep.subr.mxu0 0.0
  %725 = vmatpush1.msra.mxu0 %v46
  %726 = vmatprep.subr.mxu0 0.0
  %727 = vmatpush1.msra.mxu0 %v47
  %728 = vmatprep.subr.mxu0 0.0
  %729 = vmatpush1.msra.mxu0 %v48
  %730 = vmatprep.subr.mxu0 0.0
  %731 = vmatpush1.msra.mxu0 %v49
  %732 = vmatprep.subr.mxu0 0.0
  %733 = vmatpush1.msra.mxu0 %v50
  %734 = vmatprep.subr.mxu0 0.0
  %735 = vmatpush1.msra.mxu0 %v51
  %736 = vmatprep.subr.mxu0 0.0
  %737 = vmatpush1.msra.mxu0 %v52
  %738 = vmatprep.subr.mxu0 0.0
  %739 = vmatpush1.msra.mxu0 %v53
  %740 = vmatprep.subr.mxu0 0.0
  %741 = vmatpush1.msra.mxu0 %v54
  %742 = vmatprep.subr.mxu0 0.0
  %743 = vmatpush1.msra.mxu0 %v55
  %744 = vmatprep.subr.mxu0 0.0
  %745 = vmatpush1.msra.mxu0 %v56
  %746 = vmatprep.subr.mxu0 0.0
  %747 = vmatpush1.msra.mxu0 %v57
  %748 = vmatprep.subr.mxu0 0.0
  %749 = vmatpush1.msra.mxu0 %v58
  %750 = vmatprep.subr.mxu0 0.0
  %751 = vmatpush1.msra.mxu0 %v59
  %752 = vmatprep.subr.mxu0 0.0
  %753 = vmatpush1.msra.mxu0 %v60
  %754 = vmatprep.subr.mxu0 0.0
  %755 = vmatpush1.msra.mxu0 %v61
  %756 = vmatprep.subr.mxu0 0.0
  %757 = vmatpush1.msra.mxu0 0.0
  %758 = vmatprep.subr.mxu0 0.0
  %759 = vmatpush1.msra.mxu0 0.0
  %760 = vmatprep.subr.mxu0 0.0
  %761 = vmatpush1.msra.mxu0 0.0
  %762 = vmatprep.subr.mxu0 0.0
  %763 = vmatpush1.msra.mxu0 0.0
  %764 = vmatprep.subr.mxu0 0.0
  %765 = vmatpush1.msra.mxu0 0.0
  %766 = vmatprep.subr.mxu0 0.0
  %767 = vmatpush1.msra.mxu0 0.0
  %768 = vmatprep.subr.mxu0 0.0
  %769 = vmatpush1.msra.mxu0 0.0
  %770 = vmatprep.subr.mxu0 0.0
  %771 = vmatpush1.msra.mxu0 0.0
  %772 = vmatprep.subr.mxu0 0.0
  %773 = vmatpush1.msra.mxu0 0.0
  %774 = vmatprep.subr.mxu0 0.0
  %775 = vmatpush1.msra.mxu0 0.0
  %776 = vmatprep.subr.mxu0 0.0
  %777 = vmatpush1.msra.mxu0 0.0
  %778 = vmatprep.subr.mxu0 0.0
  %779 = vmatpush1.msra.mxu0 0.0
  %780 = vmatprep.subr.mxu0 0.0
  %781 = vmatpush1.msra.mxu0 0.0
  %782 = vmatprep.subr.mxu0 0.0
  %783 = vmatpush1.msra.mxu0 0.0
  %784 = vmatprep.subr.mxu0 0.0
  %785 = vmatpush1.msra.mxu0 0.0
  %786 = vmatprep.subr.mxu0 0.0
  %787 = vmatpush1.msra.mxu0 0.0
  %788 = vmatprep.mubr.f32.mxu0 0.0
  %789 = vmatmul.mubr.f32.gmra.mrb[0].mxu0 %v720
  %v790 = vpop.f32.mrb[0].mxu0
  %v791 = vadd.f32 0.0, %v790
  %v792 = vpop.f32.mrb[0].mxu0
  %793 = vdwg.mxu0
  %v794 = vadd.f32 %v723, %v791
  %v795 = vtanh.pop %v794
  %796 = vst [vmem:[%s722] sm:$0xff] %v795
  %v797 = vld [vmem:[#allocation2] sm:$0xff]
  %v798 = vld [vmem:[#allocation2 + $0x8] sm:$0xff]
  %v799 = vld [vmem:[#allocation2 + $0x10] sm:$0xff]
  %v800 = vld [vmem:[#allocation2 + $0x18] sm:$0xff]
  %v801 = vld [vmem:[#allocation2 + $0x20] sm:$0xff]
  %v802 = vld [vmem:[#allocation2 + $0x28] sm:$0xff]
  %v803 = vld [vmem:[#allocation2 + $0x30] sm:$0xff]
  %v804 = vld [vmem:[#allocation2 + $0x38] sm:$0xff]
  %v805 = vld [vmem:[%s5] sm:$0xff]
  %v806 = vld [vmem:[%s5 + $0x8] sm:$0xff]
  %v807 = vld [vmem:[%s5 + $0x10] sm:$0xff]
  %v808 = vld [vmem:[%s5 + $0x18] sm:$0xff]
  %v809 = vld [vmem:[%s5 + $0x20] sm:$0xff]
  %v810 = vld [vmem:[%s5 + $0x28] sm:$0xff]
  %v811 = vld [vmem:[%s5 + $0x30] sm:$0xff]
  %v812 = vld [vmem:[%s5 + $0x38] sm:$0xff]
  %v813 = vld [vmem:[%s5 + $0x40] sm:$0xff]
  %v814 = vld [vmem:[%s5 + $0x48] sm:$0xff]
  %v815 = vld [vmem:[%s5 + $0x50] sm:$0xff]
  %v816 = vld [vmem:[%s5 + $0x58] sm:$0xff]
  %v817 = vld [vmem:[%s5 + $0x60] sm:$0xff]
  %v818 = vld [vmem:[%s5 + $0x68] sm:$0xff]
  %v819 = vld [vmem:[%s5 + $0x70] sm:$0xff]
  %v820 = vld [vmem:[%s5 + $0x78] sm:$0xff]
  %v821 = vld [vmem:[%s4] sm:$0xff]
  %v822 = vld [vmem:[%s4 + $0x8] sm:$0xff]
  %v823 = vld [vmem:[%s4 + $0x10] sm:$0xff]
  %v824 = vld [vmem:[%s4 + $0x18] sm:$0xff]
  %v825 = vld [vmem:[%s4 + $0x20] sm:$0xff]
  %v826 = vld [vmem:[%s4 + $0x28] sm:$0xff]
  %v827 = vld [vmem:[%s4 + $0x30] sm:$0xff]
  %v828 = vld [vmem:[%s4 + $0x38] sm:$0xff]
  %v829 = vld [vmem:[%s4 + $0x40] sm:$0xff]
  %v830 = vld [vmem:[%s4 + $0x48] sm:$0xff]
  %v831 = vld [vmem:[%s4 + $0x50] sm:$0xff]
  %v832 = vld [vmem:[%s4 + $0x58] sm:$0xff]
  %v833 = vld [vmem:[%s4 + $0x60] sm:$0xff]
  %v834 = vld [vmem:[%s4 + $0x68] sm:$0xff]
  %v835 = vld [vmem:[%s4 + $0x70] sm:$0xff]
  %v836 = vld [vmem:[%s4 + $0x78] sm:$0xff]
  %v837 = vld [vmem:[%s6] sm:$0x1]
  %v839 = vlaneseq
  %v840 = vshrl.u32 %v839, 7
  %v841 = vsub.s32 0, %v840
  %v842 = vrot.slane %v837, %v841
  %844 = vmatprep.subr.mxu0 0.0
  %845 = vmatpush1.msra.mxu0 %v821
  %846 = vmatprep.subr.mxu0 0.0
  %847 = vmatpush1.msra.mxu0 %v822
  %848 = vmatprep.subr.mxu0 0.0
  %849 = vmatpush1.msra.mxu0 %v823
  %850 = vmatprep.subr.mxu0 0.0
  %851 = vmatpush1.msra.mxu0 %v824
  %852 = vmatprep.subr.mxu0 0.0
  %853 = vmatpush1.msra.mxu0 %v825
  %854 = vmatprep.subr.mxu0 0.0
  %855 = vmatpush1.msra.mxu0 %v826
  %856 = vmatprep.subr.mxu0 0.0
  %857 = vmatpush1.msra.mxu0 %v827
  %858 = vmatprep.subr.mxu0 0.0
  %859 = vmatpush1.msra.mxu0 %v828
  %860 = vmatprep.subr.mxu0 0.0
  %861 = vmatpush1.msra.mxu0 %v829
  %862 = vmatprep.subr.mxu0 0.0
  %863 = vmatpush1.msra.mxu0 %v830
  %864 = vmatprep.subr.mxu0 0.0
  %865 = vmatpush1.msra.mxu0 %v831
  %866 = vmatprep.subr.mxu0 0.0
  %867 = vmatpush1.msra.mxu0 %v832
  %868 = vmatprep.subr.mxu0 0.0
  %869 = vmatpush1.msra.mxu0 %v833
  %870 = vmatprep.subr.mxu0 0.0
  %871 = vmatpush1.msra.mxu0 %v834
  %872 = vmatprep.subr.mxu0 0.0
  %873 = vmatpush1.msra.mxu0 %v835
  %874 = vmatprep.subr.mxu0 0.0
  %875 = vmatpush1.msra.mxu0 %v836
  %876 = vmatprep.subr.mxu0 0.0
  %877 = vmatpush1.msra.mxu0 0.0
  %878 = vmatprep.subr.mxu0 0.0
  %879 = vmatpush1.msra.mxu0 0.0
  %880 = vmatprep.subr.mxu0 0.0
  %881 = vmatpush1.msra.mxu0 0.0
  %882 = vmatprep.subr.mxu0 0.0
  %883 = vmatpush1.msra.mxu0 0.0
  %884 = vmatprep.subr.mxu0 0.0
  %885 = vmatpush1.msra.mxu0 0.0
  %886 = vmatprep.subr.mxu0 0.0
  %887 = vmatpush1.msra.mxu0 0.0
  %888 = vmatprep.subr.mxu0 0.0
  %889 = vmatpush1.msra.mxu0 0.0
  %890 = vmatprep.subr.mxu0 0.0
  %891 = vmatpush1.msra.mxu0 0.0
  %892 = vmatprep.subr.mxu0 0.0
  %893 = vmatpush1.msra.mxu0 0.0
  %894 = vmatprep.subr.mxu0 0.0
  %895 = vmatpush1.msra.mxu0 0.0
  %896 = vmatprep.subr.mxu0 0.0
  %897 = vmatpush1.msra.mxu0 0.0
  %898 = vmatprep.subr.mxu0 0.0
  %899 = vmatpush1.msra.mxu0 0.0
  %900 = vmatprep.subr.mxu0 0.0
  %901 = vmatpush1.msra.mxu0 0.0
  %902 = vmatprep.subr.mxu0 0.0
  %903 = vmatpush1.msra.mxu0 0.0
  %904 = vmatprep.subr.mxu0 0.0
  %905 = vmatpush1.msra.mxu0 0.0
  %906 = vmatprep.subr.mxu0 0.0
  %907 = vmatpush1.msra.mxu0 0.0
  %908 = vmatprep.mubr.f32.mxu0 0.0
  %909 = vmatmul.mubr.f32.gmra.mrb[0].mxu0 %v797
  %v910 = vpop.f32.mrb[0].mxu0
  %v911 = vadd.f32 %v842, %v910
  %v912 = vpop.f32.mrb[0].mxu0
  %913 = vmatprep.mubr.f32.mxu0 0.0
  %914 = vmatmul.mubr.f32.gmra.mrb[0].mxu0 %v798
  %v915 = vpop.f32.mrb[0].mxu0
  %v916 = vadd.f32 %v842, %v915
  %v917 = vpop.f32.mrb[0].mxu0
  %918 = vmatprep.mubr.f32.mxu0 0.0
  %919 = vmatmul.mubr.f32.gmra.mrb[0].mxu0 %v799
  %v920 = vpop.f32.mrb[0].mxu0
  %v921 = vadd.f32 %v842, %v920
  %v922 = vpop.f32.mrb[0].mxu0
  %923 = vmatprep.mubr.f32.mxu0 0.0
  %924 = vmatmul.mubr.f32.gmra.mrb[0].mxu0 %v800
  %v925 = vpop.f32.mrb[0].mxu0
  %v926 = vadd.f32 %v842, %v925
  %v927 = vpop.f32.mrb[0].mxu0
  %928 = vmatprep.mubr.f32.mxu0 0.0
  %929 = vmatmul.mubr.f32.gmra.mrb[0].mxu0 %v801
  %v930 = vpop.f32.mrb[0].mxu0
  %v931 = vadd.f32 %v842, %v930
  %v932 = vpop.f32.mrb[0].mxu0
  %933 = vmatprep.mubr.f32.mxu0 0.0
  %934 = vmatmul.mubr.f32.gmra.mrb[0].mxu0 %v802
  %v935 = vpop.f32.mrb[0].mxu0
  %v936 = vadd.f32 %v842, %v935
  %v937 = vpop.f32.mrb[0].mxu0
  %938 = vmatprep.mubr.f32.mxu0 0.0
  %939 = vmatmul.mubr.f32.gmra.mrb[0].mxu0 %v803
  %v940 = vpop.f32.mrb[0].mxu0
  %v941 = vadd.f32 %v842, %v940
  %v942 = vpop.f32.mrb[0].mxu0
  %943 = vmatprep.mubr.f32.mxu0 0.0
  %944 = vmatmul.mubr.f32.gmra.mrb[0].mxu0 %v804
  %v945 = vpop.f32.mrb[0].mxu0
  %v946 = vadd.f32 %v842, %v945
  %v947 = vpop.f32.mrb[0].mxu0
  %948 = vdwg.mxu0
  %949 = vst [vmem:[#allocation2] sm:$0xff] %v911
  %950 = vst [vmem:[#allocation2 + $0x8] sm:$0xff] %v916
  %951 = vst [vmem:[#allocation2 + $0x10] sm:$0xff] %v921
  %952 = vst [vmem:[#allocation2 + $0x18] sm:$0xff] %v926
  %953 = vst [vmem:[#allocation2 + $0x20] sm:$0xff] %v931
  %954 = vst [vmem:[#allocation2 + $0x28] sm:$0xff] %v936
  %955 = vst [vmem:[#allocation2 + $0x30] sm:$0xff] %v941
  %956 = vst [vmem:[#allocation2 + $0x38] sm:$0xff] %v946
  %v957 = vld [vmem:[#allocation2] sm:$0xff]
  %958 = vmatprep.subr.mxu0 0.0
  %959 = vmatpush1.msra.mxu0 %v805
  %960 = vmatprep.subr.mxu0 0.0
  %961 = vmatpush1.msra.mxu0 %v806
  %962 = vmatprep.subr.mxu0 0.0
  %963 = vmatpush1.msra.mxu0 %v807
  %964 = vmatprep.subr.mxu0 0.0
  %965 = vmatpush1.msra.mxu0 %v808
  %966 = vmatprep.subr.mxu0 0.0
  %967 = vmatpush1.msra.mxu0 %v809
  %968 = vmatprep.subr.mxu0 0.0
  %969 = vmatpush1.msra.mxu0 %v810
  %970 = vmatprep.subr.mxu0 0.0
  %971 = vmatpush1.msra.mxu0 %v811
  %972 = vmatprep.subr.mxu0 0.0
  %973 = vmatpush1.msra.mxu0 %v812
  %974 = vmatprep.subr.mxu0 0.0
  %975 = vmatpush1.msra.mxu0 %v813
  %976 = vmatprep.subr.mxu0 0.0
  %977 = vmatpush1.msra.mxu0 %v814
  %978 = vmatprep.subr.mxu0 0.0
  %979 = vmatpush1.msra.mxu0 %v815
  %980 = vmatprep.subr.mxu0 0.0
  %981 = vmatpush1.msra.mxu0 %v816
  %982 = vmatprep.subr.mxu0 0.0
  %983 = vmatpush1.msra.mxu0 %v817
  %984 = vmatprep.subr.mxu0 0.0
  %985 = vmatpush1.msra.mxu0 %v818
  %986 = vmatprep.subr.mxu0 0.0
  %987 = vmatpush1.msra.mxu0 %v819
  %988 = vmatprep.subr.mxu0 0.0
  %989 = vmatpush1.msra.mxu0 %v820
  %990 = vmatprep.subr.mxu0 0.0
  %991 = vmatpush1.msra.mxu0 0.0
  %992 = vmatprep.subr.mxu0 0.0
  %993 = vmatpush1.msra.mxu0 0.0
  %994 = vmatprep.subr.mxu0 0.0
  %995 = vmatpush1.msra.mxu0 0.0
  %996 = vmatprep.subr.mxu0 0.0
  %997 = vmatpush1.msra.mxu0 0.0
  %998 = vmatprep.subr.mxu0 0.0
  %999 = vmatpush1.msra.mxu0 0.0
  %1000 = vmatprep.subr.mxu0 0.0
  %1001 = vmatpush1.msra.mxu0 0.0
  %1002 = vmatprep.subr.mxu0 0.0
  %1003 = vmatpush1.msra.mxu0 0.0
  %1004 = vmatprep.subr.mxu0 0.0
  %1005 = vmatpush1.msra.mxu0 0.0
  %1006 = vmatprep.subr.mxu0 0.0
  %1007 = vmatpush1.msra.mxu0 0.0
  %1008 = vmatprep.subr.mxu0 0.0
  %1009 = vmatpush1.msra.mxu0 0.0
  %1010 = vmatprep.subr.mxu0 0.0
  %1011 = vmatpush1.msra.mxu0 0.0
  %1012 = vmatprep.subr.mxu0 0.0
  %1013 = vmatpush1.msra.mxu0 0.0
  %1014 = vmatprep.subr.mxu0 0.0
  %1015 = vmatpush1.msra.mxu0 0.0
  %1016 = vmatprep.subr.mxu0 0.0
  %1017 = vmatpush1.msra.mxu0 0.0
  %1018 = vmatprep.subr.mxu0 0.0
  %1019 = vmatpush1.msra.mxu0 0.0
  %1020 = vmatprep.subr.mxu0 0.0
  %1021 = vmatpush1.msra.mxu0 0.0
  %1022 = vmatprep.mubr.f32.mxu0 0.0
  %1023 = vmatmul.mubr.f32.gmra.mrb[0].mxu0 0.0
  %v1024 = vpop.f32.mrb[0].mxu0
  %v1025 = vadd.f32 0.0, %v1024
  %v1026 = vpop.f32.mrb[0].mxu0
  %1027 = vdwg.mxu0
  %v1028 = vadd.f32 %v957, %v1025
  %v1029 = vtanh.pop %v1028
  %v1030 = vld [vmem:[%s272] sm:$0xff]
  %1031 = vmatprep.subr.mxu0 0.0
  %1032 = vmatpush1.msra.mxu0 %v805
  %1033 = vmatprep.subr.mxu0 0.0
  %1034 = vmatpush1.msra.mxu0 %v806
  %1035 = vmatprep.subr.mxu0 0.0
  %1036 = vmatpush1.msra.mxu0 %v807
  %1037 = vmatprep.subr.mxu0 0.0
  %1038 = vmatpush1.msra.mxu0 %v808
  %1039 = vmatprep.subr.mxu0 0.0
  %1040 = vmatpush1.msra.mxu0 %v809
  %1041 = vmatprep.subr.mxu0 0.0
  %1042 = vmatpush1.msra.mxu0 %v810
  %1043 = vmatprep.subr.mxu0 0.0
  %1044 = vmatpush1.msra.mxu0 %v811
  %1045 = vmatprep.subr.mxu0 0.0
  %1046 = vmatpush1.msra.mxu0 %v812
  %1047 = vmatprep.subr.mxu0 0.0
  %1048 = vmatpush1.msra.mxu0 %v813
  %1049 = vmatprep.subr.mxu0 0.0
  %1050 = vmatpush1.msra.mxu0 %v814
  %1051 = vmatprep.subr.mxu0 0.0
  %1052 = vmatpush1.msra.mxu0 %v815
  %1053 = vmatprep.subr.mxu0 0.0
  %1054 = vmatpush1.msra.mxu0 %v816
  %1055 = vmatprep.subr.mxu0 0.0
  %1056 = vmatpush1.msra.mxu0 %v817
  %1057 = vmatprep.subr.mxu0 0.0
  %1058 = vmatpush1.msra.mxu0 %v818
  %1059 = vmatprep.subr.mxu0 0.0
  %1060 = vmatpush1.msra.mxu0 %v819
  %1061 = vmatprep.subr.mxu0 0.0
  %1062 = vmatpush1.msra.mxu0 %v820
  %1063 = vmatprep.subr.mxu0 0.0
  %1064 = vmatpush1.msra.mxu0 0.0
  %1065 = vmatprep.subr.mxu0 0.0
  %1066 = vmatpush1.msra.mxu0 0.0
  %1067 = vmatprep.subr.mxu0 0.0
  %1068 = vmatpush1.msra.mxu0 0.0
  %1069 = vmatprep.subr.mxu0 0.0
  %1070 = vmatpush1.msra.mxu0 0.0
  %1071 = vmatprep.subr.mxu0 0.0
  %1072 = vmatpush1.msra.mxu0 0.0
  %1073 = vmatprep.subr.mxu0 0.0
  %1074 = vmatpush1.msra.mxu0 0.0
  %1075 = vmatprep.subr.mxu0 0.0
  %1076 = vmatpush1.msra.mxu0 0.0
  %1077 = vmatprep.subr.mxu0 0.0
  %1078 = vmatpush1.msra.mxu0 0.0
  %1079 = vmatprep.subr.mxu0 0.0
  %1080 = vmatpush1.msra.mxu0 0.0
  %1081 = vmatprep.subr.mxu0 0.0
  %1082 = vmatpush1.msra.mxu0 0.0
  %1083 = vmatprep.subr.mxu0 0.0
  %1084 = vmatpush1.msra.mxu0 0.0
  %1085 = vmatprep.subr.mxu0 0.0
  %1086 = vmatpush1.msra.mxu0 0.0
  %1087 = vmatprep.subr.mxu0 0.0
  %1088 = vmatpush1.msra.mxu0 0.0
  %1089 = vmatprep.subr.mxu0 0.0
  %1090 = vmatpush1.msra.mxu0 0.0
  %1091 = vmatprep.subr.mxu0 0.0
  %1092 = vmatpush1.msra.mxu0 0.0
  %1093 = vmatprep.subr.mxu0 0.0
  %1094 = vmatpush1.msra.mxu0 0.0
  %1095 = vmatprep.mubr.f32.mxu0 0.0
  %1096 = vmatmul.mubr.f32.gmra.mrb[0].mxu0 %v1029
  %v1097 = vpop.f32.mrb[0].mxu0
  %v1098 = vadd.f32 0.0, %v1097
  %v1099 = vpop.f32.mrb[0].mxu0
  %1100 = vdwg.mxu0
  %v1101 = vadd.f32 %v1030, %v1098
  %v1102 = vtanh.pop %v1101
  %v1103 = vld [vmem:[%s347] sm:$0xff]
  %1104 = vmatprep.subr.mxu0 0.0
  %1105 = vmatpush1.msra.mxu0 %v805
  %1106 = vmatprep.subr.mxu0 0.0
  %1107 = vmatpush1.msra.mxu0 %v806
  %1108 = vmatprep.subr.mxu0 0.0
  %1109 = vmatpush1.msra.mxu0 %v807
  %1110 = vmatprep.subr.mxu0 0.0
  %1111 = vmatpush1.msra.mxu0 %v808
  %1112 = vmatprep.subr.mxu0 0.0
  %1113 = vmatpush1.msra.mxu0 %v809
  %1114 = vmatprep.subr.mxu0 0.0
  %1115 = vmatpush1.msra.mxu0 %v810
  %1116 = vmatprep.subr.mxu0 0.0
  %1117 = vmatpush1.msra.mxu0 %v811
  %1118 = vmatprep.subr.mxu0 0.0
  %1119 = vmatpush1.msra.mxu0 %v812
  %1120 = vmatprep.subr.mxu0 0.0
  %1121 = vmatpush1.msra.mxu0 %v813
  %1122 = vmatprep.subr.mxu0 0.0
  %1123 = vmatpush1.msra.mxu0 %v814
  %1124 = vmatprep.subr.mxu0 0.0
  %1125 = vmatpush1.msra.mxu0 %v815
  %1126 = vmatprep.subr.mxu0 0.0
  %1127 = vmatpush1.msra.mxu0 %v816
  %1128 = vmatprep.subr.mxu0 0.0
  %1129 = vmatpush1.msra.mxu0 %v817
  %1130 = vmatprep.subr.mxu0 0.0
  %1131 = vmatpush1.msra.mxu0 %v818
  %1132 = vmatprep.subr.mxu0 0.0
  %1133 = vmatpush1.msra.mxu0 %v819
  %1134 = vmatprep.subr.mxu0 0.0
  %1135 = vmatpush1.msra.mxu0 %v820
  %1136 = vmatprep.subr.mxu0 0.0
  %1137 = vmatpush1.msra.mxu0 0.0
  %1138 = vmatprep.subr.mxu0 0.0
  %1139 = vmatpush1.msra.mxu0 0.0
  %1140 = vmatprep.subr.mxu0 0.0
  %1141 = vmatpush1.msra.mxu0 0.0
  %1142 = vmatprep.subr.mxu0 0.0
  %1143 = vmatpush1.msra.mxu0 0.0
  %1144 = vmatprep.subr.mxu0 0.0
  %1145 = vmatpush1.msra.mxu0 0.0
  %1146 = vmatprep.subr.mxu0 0.0
  %1147 = vmatpush1.msra.mxu0 0.0
  %1148 = vmatprep.subr.mxu0 0.0
  %1149 = vmatpush1.msra.mxu0 0.0
  %1150 = vmatprep.subr.mxu0 0.0
  %1151 = vmatpush1.msra.mxu0 0.0
  %1152 = vmatprep.subr.mxu0 0.0
  %1153 = vmatpush1.msra.mxu0 0.0
  %1154 = vmatprep.subr.mxu0 0.0
  %1155 = vmatpush1.msra.mxu0 0.0
  %1156 = vmatprep.subr.mxu0 0.0
  %1157 = vmatpush1.msra.mxu0 0.0
  %1158 = vmatprep.subr.mxu0 0.0
  %1159 = vmatpush1.msra.mxu0 0.0
  %1160 = vmatprep.subr.mxu0 0.0
  %1161 = vmatpush1.msra.mxu0 0.0
  %1162 = vmatprep.subr.mxu0 0.0
  %1163 = vmatpush1.msra.mxu0 0.0
  %1164 = vmatprep.subr.mxu0 0.0
  %1165 = vmatpush1.msra.mxu0 0.0
  %1166 = vmatprep.subr.mxu0 0.0
  %1167 = vmatpush1.msra.mxu0 0.0
  %1168 = vmatprep.mubr.f32.mxu0 0.0
  %1169 = vmatmul.mubr.f32.gmra.mrb[0].mxu0 %v1102
  %v1170 = vpop.f32.mrb[0].mxu0
  %v1171 = vadd.f32 0.0, %v1170
  %v1172 = vpop.f32.mrb[0].mxu0
  %1173 = vdwg.mxu0
  %v1174 = vadd.f32 %v1103, %v1171
  %v1175 = vtanh.pop %v1174
  %v1176 = vld [vmem:[%s422] sm:$0xff]
  %1177 = vmatprep.subr.mxu0 0.0
  %1178 = vmatpush1.msra.mxu0 %v805
  %1179 = vmatprep.subr.mxu0 0.0
  %1180 = vmatpush1.msra.mxu0 %v806
  %1181 = vmatprep.subr.mxu0 0.0
  %1182 = vmatpush1.msra.mxu0 %v807
  %1183 = vmatprep.subr.mxu0 0.0
  %1184 = vmatpush1.msra.mxu0 %v808
  %1185 = vmatprep.subr.mxu0 0.0
  %1186 = vmatpush1.msra.mxu0 %v809
  %1187 = vmatprep.subr.mxu0 0.0
  %1188 = vmatpush1.msra.mxu0 %v810
  %1189 = vmatprep.subr.mxu0 0.0
  %1190 = vmatpush1.msra.mxu0 %v811
  %1191 = vmatprep.subr.mxu0 0.0
  %1192 = vmatpush1.msra.mxu0 %v812
  %1193 = vmatprep.subr.mxu0 0.0
  %1194 = vmatpush1.msra.mxu0 %v813
  %1195 = vmatprep.subr.mxu0 0.0
  %1196 = vmatpush1.msra.mxu0 %v814
  %1197 = vmatprep.subr.mxu0 0.0
  %1198 = vmatpush1.msra.mxu0 %v815
  %1199 = vmatprep.subr.mxu0 0.0
  %1200 = vmatpush1.msra.mxu0 %v816
  %1201 = vmatprep.subr.mxu0 0.0
  %1202 = vmatpush1.msra.mxu0 %v817
  %1203 = vmatprep.subr.mxu0 0.0
  %1204 = vmatpush1.msra.mxu0 %v818
  %1205 = vmatprep.subr.mxu0 0.0
  %1206 = vmatpush1.msra.mxu0 %v819
  %1207 = vmatprep.subr.mxu0 0.0
  %1208 = vmatpush1.msra.mxu0 %v820
  %1209 = vmatprep.subr.mxu0 0.0
  %1210 = vmatpush1.msra.mxu0 0.0
  %1211 = vmatprep.subr.mxu0 0.0
  %1212 = vmatpush1.msra.mxu0 0.0
  %1213 = vmatprep.subr.mxu0 0.0
  %1214 = vmatpush1.msra.mxu0 0.0
  %1215 = vmatprep.subr.mxu0 0.0
  %1216 = vmatpush1.msra.mxu0 0.0
  %1217 = vmatprep.subr.mxu0 0.0
  %1218 = vmatpush1.msra.mxu0 0.0
  %1219 = vmatprep.subr.mxu0 0.0
  %1220 = vmatpush1.msra.mxu0 0.0
  %1221 = vmatprep.subr.mxu0 0.0
  %1222 = vmatpush1.msra.mxu0 0.0
  %1223 = vmatprep.subr.mxu0 0.0
  %1224 = vmatpush1.msra.mxu0 0.0
  %1225 = vmatprep.subr.mxu0 0.0
  %1226 = vmatpush1.msra.mxu0 0.0
  %1227 = vmatprep.subr.mxu0 0.0
  %1228 = vmatpush1.msra.mxu0 0.0
  %1229 = vmatprep.subr.mxu0 0.0
  %1230 = vmatpush1.msra.mxu0 0.0
  %1231 = vmatprep.subr.mxu0 0.0
  %1232 = vmatpush1.msra.mxu0 0.0
  %1233 = vmatprep.subr.mxu0 0.0
  %1234 = vmatpush1.msra.mxu0 0.0
  %1235 = vmatprep.subr.mxu0 0.0
  %1236 = vmatpush1.msra.mxu0 0.0
  %1237 = vmatprep.subr.mxu0 0.0
  %1238 = vmatpush1.msra.mxu0 0.0
  %1239 = vmatprep.subr.mxu0 0.0
  %1240 = vmatpush1.msra.mxu0 0.0
  %1241 = vmatprep.mubr.f32.mxu0 0.0
  %1242 = vmatmul.mubr.f32.gmra.mrb[0].mxu0 %v1175
  %v1243 = vpop.f32.mrb[0].mxu0
  %v1244 = vadd.f32 0.0, %v1243
  %v1245 = vpop.f32.mrb[0].mxu0
  %1246 = vdwg.mxu0
  %v1247 = vadd.f32 %v1176, %v1244
  %v1248 = vtanh.pop %v1247
  %v1249 = vld [vmem:[%s497] sm:$0xff]
  %1250 = vmatprep.subr.mxu0 0.0
  %1251 = vmatpush1.msra.mxu0 %v805
  %1252 = vmatprep.subr.mxu0 0.0
  %1253 = vmatpush1.msra.mxu0 %v806
  %1254 = vmatprep.subr.mxu0 0.0
  %1255 = vmatpush1.msra.mxu0 %v807
  %1256 = vmatprep.subr.mxu0 0.0
  %1257 = vmatpush1.msra.mxu0 %v808
  %1258 = vmatprep.subr.mxu0 0.0
  %1259 = vmatpush1.msra.mxu0 %v809
  %1260 = vmatprep.subr.mxu0 0.0
  %1261 = vmatpush1.msra.mxu0 %v810
  %1262 = vmatprep.subr.mxu0 0.0
  %1263 = vmatpush1.msra.mxu0 %v811
  %1264 = vmatprep.subr.mxu0 0.0
  %1265 = vmatpush1.msra.mxu0 %v812
  %1266 = vmatprep.subr.mxu0 0.0
  %1267 = vmatpush1.msra.mxu0 %v813
  %1268 = vmatprep.subr.mxu0 0.0
  %1269 = vmatpush1.msra.mxu0 %v814
  %1270 = vmatprep.subr.mxu0 0.0
  %1271 = vmatpush1.msra.mxu0 %v815
  %1272 = vmatprep.subr.mxu0 0.0
  %1273 = vmatpush1.msra.mxu0 %v816
  %1274 = vmatprep.subr.mxu0 0.0
  %1275 = vmatpush1.msra.mxu0 %v817
  %1276 = vmatprep.subr.mxu0 0.0
  %1277 = vmatpush1.msra.mxu0 %v818
  %1278 = vmatprep.subr.mxu0 0.0
  %1279 = vmatpush1.msra.mxu0 %v819
  %1280 = vmatprep.subr.mxu0 0.0
  %1281 = vmatpush1.msra.mxu0 %v820
  %1282 = vmatprep.subr.mxu0 0.0
  %1283 = vmatpush1.msra.mxu0 0.0
  %1284 = vmatprep.subr.mxu0 0.0
  %1285 = vmatpush1.msra.mxu0 0.0
  %1286 = vmatprep.subr.mxu0 0.0
  %1287 = vmatpush1.msra.mxu0 0.0
  %1288 = vmatprep.subr.mxu0 0.0
  %1289 = vmatpush1.msra.mxu0 0.0
  %1290 = vmatprep.subr.mxu0 0.0
  %1291 = vmatpush1.msra.mxu0 0.0
  %1292 = vmatprep.subr.mxu0 0.0
  %1293 = vmatpush1.msra.mxu0 0.0
  %1294 = vmatprep.subr.mxu0 0.0
  %1295 = vmatpush1.msra.mxu0 0.0
  %1296 = vmatprep.subr.mxu0 0.0
  %1297 = vmatpush1.msra.mxu0 0.0
  %1298 = vmatprep.subr.mxu0 0.0
  %1299 = vmatpush1.msra.mxu0 0.0
  %1300 = vmatprep.subr.mxu0 0.0
  %1301 = vmatpush1.msra.mxu0 0.0
  %1302 = vmatprep.subr.mxu0 0.0
  %1303 = vmatpush1.msra.mxu0 0.0
  %1304 = vmatprep.subr.mxu0 0.0
  %1305 = vmatpush1.msra.mxu0 0.0
  %1306 = vmatprep.subr.mxu0 0.0
  %1307 = vmatpush1.msra.mxu0 0.0
  %1308 = vmatprep.subr.mxu0 0.0
  %1309 = vmatpush1.msra.mxu0 0.0
  %1310 = vmatprep.subr.mxu0 0.0
  %1311 = vmatpush1.msra.mxu0 0.0
  %1312 = vmatprep.subr.mxu0 0.0
  %1313 = vmatpush1.msra.mxu0 0.0
  %1314 = vmatprep.mubr.f32.mxu0 0.0
  %1315 = vmatmul.mubr.f32.gmra.mrb[0].mxu0 %v1248
  %v1316 = vpop.f32.mrb[0].mxu0
  %v1317 = vadd.f32 0.0, %v1316
  %v1318 = vpop.f32.mrb[0].mxu0
  %1319 = vdwg.mxu0
  %v1320 = vadd.f32 %v1249, %v1317
  %v1321 = vtanh.pop %v1320
  %v1322 = vld [vmem:[%s572] sm:$0xff]
  %1323 = vmatprep.subr.mxu0 0.0
  %1324 = vmatpush1.msra.mxu0 %v805
  %1325 = vmatprep.subr.mxu0 0.0
  %1326 = vmatpush1.msra.mxu0 %v806
  %1327 = vmatprep.subr.mxu0 0.0
  %1328 = vmatpush1.msra.mxu0 %v807
  %1329 = vmatprep.subr.mxu0 0.0
  %1330 = vmatpush1.msra.mxu0 %v808
  %1331 = vmatprep.subr.mxu0 0.0
  %1332 = vmatpush1.msra.mxu0 %v809
  %1333 = vmatprep.subr.mxu0 0.0
  %1334 = vmatpush1.msra.mxu0 %v810
  %1335 = vmatprep.subr.mxu0 0.0
  %1336 = vmatpush1.msra.mxu0 %v811
  %1337 = vmatprep.subr.mxu0 0.0
  %1338 = vmatpush1.msra.mxu0 %v812
  %1339 = vmatprep.subr.mxu0 0.0
  %1340 = vmatpush1.msra.mxu0 %v813
  %1341 = vmatprep.subr.mxu0 0.0
  %1342 = vmatpush1.msra.mxu0 %v814
  %1343 = vmatprep.subr.mxu0 0.0
  %1344 = vmatpush1.msra.mxu0 %v815
  %1345 = vmatprep.subr.mxu0 0.0
  %1346 = vmatpush1.msra.mxu0 %v816
  %1347 = vmatprep.subr.mxu0 0.0
  %1348 = vmatpush1.msra.mxu0 %v817
  %1349 = vmatprep.subr.mxu0 0.0
  %1350 = vmatpush1.msra.mxu0 %v818
  %1351 = vmatprep.subr.mxu0 0.0
  %1352 = vmatpush1.msra.mxu0 %v819
  %1353 = vmatprep.subr.mxu0 0.0
  %1354 = vmatpush1.msra.mxu0 %v820
  %1355 = vmatprep.subr.mxu0 0.0
  %1356 = vmatpush1.msra.mxu0 0.0
  %1357 = vmatprep.subr.mxu0 0.0
  %1358 = vmatpush1.msra.mxu0 0.0
  %1359 = vmatprep.subr.mxu0 0.0
  %1360 = vmatpush1.msra.mxu0 0.0
  %1361 = vmatprep.subr.mxu0 0.0
  %1362 = vmatpush1.msra.mxu0 0.0
  %1363 = vmatprep.subr.mxu0 0.0
  %1364 = vmatpush1.msra.mxu0 0.0
  %1365 = vmatprep.subr.mxu0 0.0
  %1366 = vmatpush1.msra.mxu0 0.0
  %1367 = vmatprep.subr.mxu0 0.0
  %1368 = vmatpush1.msra.mxu0 0.0
  %1369 = vmatprep.subr.mxu0 0.0
  %1370 = vmatpush1.msra.mxu0 0.0
  %1371 = vmatprep.subr.mxu0 0.0
  %1372 = vmatpush1.msra.mxu0 0.0
  %1373 = vmatprep.subr.mxu0 0.0
  %1374 = vmatpush1.msra.mxu0 0.0
  %1375 = vmatprep.subr.mxu0 0.0
  %1376 = vmatpush1.msra.mxu0 0.0
  %1377 = vmatprep.subr.mxu0 0.0
  %1378 = vmatpush1.msra.mxu0 0.0
  %1379 = vmatprep.subr.mxu0 0.0
  %1380 = vmatpush1.msra.mxu0 0.0
  %1381 = vmatprep.subr.mxu0 0.0
  %1382 = vmatpush1.msra.mxu0 0.0
  %1383 = vmatprep.subr.mxu0 0.0
  %1384 = vmatpush1.msra.mxu0 0.0
  %1385 = vmatprep.subr.mxu0 0.0
  %1386 = vmatpush1.msra.mxu0 0.0
  %1387 = vmatprep.mubr.f32.mxu0 0.0
  %1388 = vmatmul.mubr.f32.gmra.mrb[0].mxu0 %v1321
  %v1389 = vpop.f32.mrb[0].mxu0
  %v1390 = vadd.f32 0.0, %v1389
  %v1391 = vpop.f32.mrb[0].mxu0
  %1392 = vdwg.mxu0
  %v1393 = vadd.f32 %v1322, %v1390
  %v1394 = vtanh.pop %v1393
  %v1395 = vld [vmem:[%s647] sm:$0xff]
  %1396 = vmatprep.subr.mxu0 0.0
  %1397 = vmatpush1.msra.mxu0 %v805
  %1398 = vmatprep.subr.mxu0 0.0
  %1399 = vmatpush1.msra.mxu0 %v806
  %1400 = vmatprep.subr.mxu0 0.0
  %1401 = vmatpush1.msra.mxu0 %v807
  %1402 = vmatprep.subr.mxu0 0.0
  %1403 = vmatpush1.msra.mxu0 %v808
  %1404 = vmatprep.subr.mxu0 0.0
  %1405 = vmatpush1.msra.mxu0 %v809
  %1406 = vmatprep.subr.mxu0 0.0
  %1407 = vmatpush1.msra.mxu0 %v810
  %1408 = vmatprep.subr.mxu0 0.0
  %1409 = vmatpush1.msra.mxu0 %v811
  %1410 = vmatprep.subr.mxu0 0.0
  %1411 = vmatpush1.msra.mxu0 %v812
  %1412 = vmatprep.subr.mxu0 0.0
  %1413 = vmatpush1.msra.mxu0 %v813
  %1414 = vmatprep.subr.mxu0 0.0
  %1415 = vmatpush1.msra.mxu0 %v814
  %1416 = vmatprep.subr.mxu0 0.0
  %1417 = vmatpush1.msra.mxu0 %v815
  %1418 = vmatprep.subr.mxu0 0.0
  %1419 = vmatpush1.msra.mxu0 %v816
  %1420 = vmatprep.subr.mxu0 0.0
  %1421 = vmatpush1.msra.mxu0 %v817
  %1422 = vmatprep.subr.mxu0 0.0
  %1423 = vmatpush1.msra.mxu0 %v818
  %1424 = vmatprep.subr.mxu0 0.0
  %1425 = vmatpush1.msra.mxu0 %v819
  %1426 = vmatprep.subr.mxu0 0.0
  %1427 = vmatpush1.msra.mxu0 %v820
  %1428 = vmatprep.subr.mxu0 0.0
  %1429 = vmatpush1.msra.mxu0 0.0
  %1430 = vmatprep.subr.mxu0 0.0
  %1431 = vmatpush1.msra.mxu0 0.0
  %1432 = vmatprep.subr.mxu0 0.0
  %1433 = vmatpush1.msra.mxu0 0.0
  %1434 = vmatprep.subr.mxu0 0.0
  %1435 = vmatpush1.msra.mxu0 0.0
  %1436 = vmatprep.subr.mxu0 0.0
  %1437 = vmatpush1.msra.mxu0 0.0
  %1438 = vmatprep.subr.mxu0 0.0
  %1439 = vmatpush1.msra.mxu0 0.0
  %1440 = vmatprep.subr.mxu0 0.0
  %1441 = vmatpush1.msra.mxu0 0.0
  %1442 = vmatprep.subr.mxu0 0.0
  %1443 = vmatpush1.msra.mxu0 0.0
  %1444 = vmatprep.subr.mxu0 0.0
  %1445 = vmatpush1.msra.mxu0 0.0
  %1446 = vmatprep.subr.mxu0 0.0
  %1447 = vmatpush1.msra.mxu0 0.0
  %1448 = vmatprep.subr.mxu0 0.0
  %1449 = vmatpush1.msra.mxu0 0.0
  %1450 = vmatprep.subr.mxu0 0.0
  %1451 = vmatpush1.msra.mxu0 0.0
  %1452 = vmatprep.subr.mxu0 0.0
  %1453 = vmatpush1.msra.mxu0 0.0
  %1454 = vmatprep.subr.mxu0 0.0
  %1455 = vmatpush1.msra.mxu0 0.0
  %1456 = vmatprep.subr.mxu0 0.0
  %1457 = vmatpush1.msra.mxu0 0.0
  %1458 = vmatprep.subr.mxu0 0.0
  %1459 = vmatpush1.msra.mxu0 0.0
  %1460 = vmatprep.mubr.f32.mxu0 0.0
  %1461 = vmatmul.mubr.f32.gmra.mrb[0].mxu0 %v1394
  %v1462 = vpop.f32.mrb[0].mxu0
  %v1463 = vadd.f32 0.0, %v1462
  %v1464 = vpop.f32.mrb[0].mxu0
  %1465 = vdwg.mxu0
  %v1466 = vadd.f32 %v1395, %v1463
  %v1467 = vtanh.pop %v1466
  %v1468 = vld [vmem:[%s722] sm:$0xff]
  %1469 = vmatprep.subr.mxu0 0.0
  %1470 = vmatpush1.msra.mxu0 %v805
  %1471 = vmatprep.subr.mxu0 0.0
  %1472 = vmatpush1.msra.mxu0 %v806
  %1473 = vmatprep.subr.mxu0 0.0
  %1474 = vmatpush1.msra.mxu0 %v807
  %1475 = vmatprep.subr.mxu0 0.0
  %1476 = vmatpush1.msra.mxu0 %v808
  %1477 = vmatprep.subr.mxu0 0.0
  %1478 = vmatpush1.msra.mxu0 %v809
  %1479 = vmatprep.subr.mxu0 0.0
  %1480 = vmatpush1.msra.mxu0 %v810
  %1481 = vmatprep.subr.mxu0 0.0
  %1482 = vmatpush1.msra.mxu0 %v811
  %1483 = vmatprep.subr.mxu0 0.0
  %1484 = vmatpush1.msra.mxu0 %v812
  %1485 = vmatprep.subr.mxu0 0.0
  %1486 = vmatpush1.msra.mxu0 %v813
  %1487 = vmatprep.subr.mxu0 0.0
  %1488 = vmatpush1.msra.mxu0 %v814
  %1489 = vmatprep.subr.mxu0 0.0
  %1490 = vmatpush1.msra.mxu0 %v815
  %1491 = vmatprep.subr.mxu0 0.0
  %1492 = vmatpush1.msra.mxu0 %v816
  %1493 = vmatprep.subr.mxu0 0.0
  %1494 = vmatpush1.msra.mxu0 %v817
  %1495 = vmatprep.subr.mxu0 0.0
  %1496 = vmatpush1.msra.mxu0 %v818
  %1497 = vmatprep.subr.mxu0 0.0
  %1498 = vmatpush1.msra.mxu0 %v819
  %1499 = vmatprep.subr.mxu0 0.0
  %1500 = vmatpush1.msra.mxu0 %v820
  %1501 = vmatprep.subr.mxu0 0.0
  %1502 = vmatpush1.msra.mxu0 0.0
  %1503 = vmatprep.subr.mxu0 0.0
  %1504 = vmatpush1.msra.mxu0 0.0
  %1505 = vmatprep.subr.mxu0 0.0
  %1506 = vmatpush1.msra.mxu0 0.0
  %1507 = vmatprep.subr.mxu0 0.0
  %1508 = vmatpush1.msra.mxu0 0.0
  %1509 = vmatprep.subr.mxu0 0.0
  %1510 = vmatpush1.msra.mxu0 0.0
  %1511 = vmatprep.subr.mxu0 0.0
  %1512 = vmatpush1.msra.mxu0 0.0
  %1513 = vmatprep.subr.mxu0 0.0
  %1514 = vmatpush1.msra.mxu0 0.0
  %1515 = vmatprep.subr.mxu0 0.0
  %1516 = vmatpush1.msra.mxu0 0.0
  %1517 = vmatprep.subr.mxu0 0.0
  %1518 = vmatpush1.msra.mxu0 0.0
  %1519 = vmatprep.subr.mxu0 0.0
  %1520 = vmatpush1.msra.mxu0 0.0
  %1521 = vmatprep.subr.mxu0 0.0
  %1522 = vmatpush1.msra.mxu0 0.0
  %1523 = vmatprep.subr.mxu0 0.0
  %1524 = vmatpush1.msra.mxu0 0.0
  %1525 = vmatprep.subr.mxu0 0.0
  %1526 = vmatpush1.msra.mxu0 0.0
  %1527 = vmatprep.subr.mxu0 0.0
  %1528 = vmatpush1.msra.mxu0 0.0
  %1529 = vmatprep.subr.mxu0 0.0
  %1530 = vmatpush1.msra.mxu0 0.0
  %1531 = vmatprep.subr.mxu0 0.0
  %1532 = vmatpush1.msra.mxu0 0.0
  %1533 = vmatprep.mubr.f32.mxu0 0.0
  %1534 = vmatmul.mubr.f32.gmra.mrb[0].mxu0 %v1467
  %v1535 = vpop.f32.mrb[0].mxu0
  %v1536 = vadd.f32 0.0, %v1535
  %v1537 = vpop.f32.mrb[0].mxu0
  %1538 = vdwg.mxu0
  %v1539 = vadd.f32 %v1468, %v1536
  %v1540 = vtanh.pop %v1539
  %1541 = vadd.xlane.f32.xlu0 %v1540
  %v1542 = vpop.xlane.xlu0 %1541
  %v1543 = vmul.f32 %v1542, 0.03125
  %v1544 = vmul.f32 %v1540, %v1540
  %1545 = vadd.xlane.f32.xlu0 %v1544
  %v1546 = vpop.xlane.xlu0 %1545
  %v1547 = vmul.f32 %v1546, 0.03125
  %v1548 = vmul.f32 %v1543, %v1543
  %v1549 = vsub.f32 %v1547, %v1548
  %v1550 = vsub.f32 %v1540, %v1543
  %v1551 = vadd.f32 %v1549, 1e-05
  %v1552 = vrsqrt.pop %v1551
  %v1553 = vmul.f32 %v1550, %v1552
  %v1554 = vld [vmem:[%s7] sm:$0x1]
  %v1556 = vlaneseq
  %v1557 = vshrl.u32 %v1556, 7
  %v1558 = vsub.s32 0, %v1557
  %v1559 = vrot.slane %v1554, %v1558
  %v1561 = vmul.f32 %v1553, %v1559
  %v1562 = vld [vmem:[%s8] sm:$0x1]
  %v1564 = vlaneseq
  %v1565 = vshrl.u32 %v1564, 7
  %v1566 = vsub.s32 0, %v1565
  %v1567 = vrot.slane %v1562, %v1566
  %v1569 = vadd.f32 %v1561, %v1567
  %v1570 = vld [vmem:[%s9] sm:$0xff]
  %v1571 = vld [vmem:[%s9 + $0x8] sm:$0xff]
  %v1572 = vld [vmem:[%s9 + $0x10] sm:$0xff]
  %v1573 = vld [vmem:[%s9 + $0x18] sm:$0xff]
  %v1574 = vld [vmem:[%s9 + $0x20] sm:$0xff]
  %v1575 = vld [vmem:[%s9 + $0x28] sm:$0xff]
  %v1576 = vld [vmem:[%s9 + $0x30] sm:$0xff]
  %v1577 = vld [vmem:[%s9 + $0x38] sm:$0xff]
  %v1578 = vld [vmem:[%s9 + $0x40] sm:$0xff]
  %v1579 = vld [vmem:[%s9 + $0x48] sm:$0xff]
  %v1580 = vld [vmem:[%s9 + $0x50] sm:$0xff]
  %v1581 = vld [vmem:[%s9 + $0x58] sm:$0xff]
  %v1582 = vld [vmem:[%s9 + $0x60] sm:$0xff]
  %v1583 = vld [vmem:[%s9 + $0x68] sm:$0xff]
  %v1584 = vld [vmem:[%s9 + $0x70] sm:$0xff]
  %v1585 = vld [vmem:[%s9 + $0x78] sm:$0xff]
  %v1586 = vld [vmem:[%s10] sm:$0x1]
  %v1588 = vlaneseq
  %v1589 = vshrl.u32 %v1588, 7
  %v1590 = vsub.s32 0, %v1589
  %v1591 = vrot.slane %v1586, %v1590
  %1593 = vmatprep.subr.mxu0 0.0
  %1594 = vmatpush1.msra.mxu0 %v1570
  %1595 = vmatprep.subr.mxu0 0.0
  %1596 = vmatpush1.msra.mxu0 %v1571
  %1597 = vmatprep.subr.mxu0 0.0
  %1598 = vmatpush1.msra.mxu0 %v1572
  %1599 = vmatprep.subr.mxu0 0.0
  %1600 = vmatpush1.msra.mxu0 %v1573
  %1601 = vmatprep.subr.mxu0 0.0
  %1602 = vmatpush1.msra.mxu0 %v1574
  %1603 = vmatprep.subr.mxu0 0.0
  %1604 = vmatpush1.msra.mxu0 %v1575
  %1605 = vmatprep.subr.mxu0 0.0
  %1606 = vmatpush1.msra.mxu0 %v1576
  %1607 = vmatprep.subr.mxu0 0.0
  %1608 = vmatpush1.msra.mxu0 %v1577
  %1609 = vmatprep.subr.mxu0 0.0
  %1610 = vmatpush1.msra.mxu0 %v1578
  %1611 = vmatprep.subr.mxu0 0.0
  %1612 = vmatpush1.msra.mxu0 %v1579
  %1613 = vmatprep.subr.mxu0 0.0
  %1614 = vmatpush1.msra.mxu0 %v1580
  %1615 = vmatprep.subr.mxu0 0.0
  %1616 = vmatpush1.msra.mxu0 %v1581
  %1617 = vmatprep.subr.mxu0 0.0
  %1618 = vmatpush1.msra.mxu0 %v1582
  %1619 = vmatprep.subr.mxu0 0.0
  %1620 = vmatpush1.msra.mxu0 %v1583
  %1621 = vmatprep.subr.mxu0 0.0
  %1622 = vmatpush1.msra.mxu0 %v1584
  %1623 = vmatprep.subr.mxu0 0.0
  %1624 = vmatpush1.msra.mxu0 %v1585
  %1625 = vmatprep.subr.mxu0 0.0
  %1626 = vmatpush1.msra.mxu0 0.0
  %1627 = vmatprep.subr.mxu0 0.0
  %1628 = vmatpush1.msra.mxu0 0.0
  %1629 = vmatprep.subr.mxu0 0.0
  %1630 = vmatpush1.msra.mxu0 0.0
  %1631 = vmatprep.subr.mxu0 0.0
  %1632 = vmatpush1.msra.mxu0 0.0
  %1633 = vmatprep.subr.mxu0 0.0
  %1634 = vmatpush1.msra.mxu0 0.0
  %1635 = vmatprep.subr.mxu0 0.0
  %1636 = vmatpush1.msra.mxu0 0.0
  %1637 = vmatprep.subr.mxu0 0.0
  %1638 = vmatpush1.msra.mxu0 0.0
  %1639 = vmatprep.subr.mxu0 0.0
  %1640 = vmatpush1.msra.mxu0 0.0
  %1641 = vmatprep.subr.mxu0 0.0
  %1642 = vmatpush1.msra.mxu0 0.0
  %1643 = vmatprep.subr.mxu0 0.0
  %1644 = vmatpush1.msra.mxu0 0.0
  %1645 = vmatprep.subr.mxu0 0.0
  %1646 = vmatpush1.msra.mxu0 0.0
  %1647 = vmatprep.subr.mxu0 0.0
  %1648 = vmatpush1.msra.mxu0 0.0
  %1649 = vmatprep.subr.mxu0 0.0
  %1650 = vmatpush1.msra.mxu0 0.0
  %1651 = vmatprep.subr.mxu0 0.0
  %1652 = vmatpush1.msra.mxu0 0.0
  %1653 = vmatprep.subr.mxu0 0.0
  %1654 = vmatpush1.msra.mxu0 0.0
  %1655 = vmatprep.subr.mxu0 0.0
  %1656 = vmatpush1.msra.mxu0 0.0
  %1657 = vmatprep.mubr.f32.mxu0 0.0
  %1658 = vmatmul.mubr.f32.gmra.mrb[0].mxu0 %v1569
  %v1659 = vpop.f32.mrb[0].mxu0
  %v1660 = vadd.f32 %v1591, %v1659
  %v1661 = vpop.f32.mrb[0].mxu0
  %1662 = vdwg.mxu0
  %1663 = vst [vmem:[%s11] sm:$0xff] %v1660
  // Predicated region
  $region46: #{rnn_forward.1} parent=0 // pred_check
    _
  $region47: #{rnn_forward.1} parent=0 // pred_check_branch
    %1665 = sbr.rel (0) target = $region49
  $region48: #{rnn_forward.1} parent=0 // pred_region
    _
  $region49: #{rnn_forward.1} parent=0 // pred_fallthru
    _
  // Predicated region
  $region50: #{rnn_forward.1} parent=0 // pred_check
    _
  $region51: #{rnn_forward.1} parent=0 // pred_check_branch
    %1667 = sbr.rel (0) target = $region53
  $region52: #{rnn_forward.1} parent=0 // pred_region
    _
  $region53: #{rnn_forward.1} parent=0 // pred_fallthru
    _

</llo_original>
